<compile_context>
chip_gen: v5e
topology: v5e:2x2
jax: 0.10.0
libtpu: 0.0.40
codegen_flags: <defaults>
</compile_context>

<pallas_src>
import math
import jax
import jax.numpy as jnp
from jax.experimental import pallas as pl
from jax.experimental.pallas import tpu as pltpu


def aush_generator_kernel(x_ref, w1_ref, b1_ref, w2_ref, b2_ref, o_ref):
    # Cast x to the matmul dtype in-kernel (no wrapper-side convert / extra
    # HBM pass).  bf16 MXU inputs, f32 accumulation.
    x = x_ref[...].astype(w1_ref.dtype)
    h = jnp.dot(x, w1_ref[...], preferred_element_type=jnp.float32)
    # f32 elementwise (VPU/EUP) -- safe on v5e (no bf16 VPU/EUP there).
    h = jax.nn.sigmoid(h + b1_ref[...])
    h = h.astype(w2_ref.dtype)                   # back to bf16 for 2nd MXU pass
    y = jnp.dot(h, w2_ref[...], preferred_element_type=jnp.float32)
    y = jax.nn.sigmoid(y + b2_ref[...])
    o_ref[...] = (y * 5.0).astype(o_ref.dtype)


def _choose_batch_tile(B, tb_max):
    """Pick the batch tile: >=2 grid steps when possible (v7x has 2 TCs and the
    'parallel' grid axis is sharded across them), sublane-aligned (mult. of 8),
    capped at tb_max to bound VMEM / keep per-step DMAs reasonable."""
    if B <= 16:
        return B                         # tiny batch: single whole-batch block
    half = (B + 1) // 2                  # ceil(B/2) -> at least 2 grid steps
    tb = ((half + 7) // 8) * 8           # round up to sublane multiple
    return max(8, min(tb, tb_max, B))


def prepare_params(w1, b1, w2, b2, *, compute_dtype=jnp.bfloat16):
    """One-time conversion of nn.Linear-layout params (w: [out, in], b: [out])
    into kernel layout: [in, out] bf16 weights, [1, out] f32 biases.
    Call this at init, NOT per forward call (hoists casts off the hot path)."""
    h_dim = w1.shape[0]
    d_dim = w2.shape[0]
    return (jnp.asarray(w1.T, dtype=compute_dtype),
            jnp.asarray(b1, dtype=jnp.float32).reshape(1, h_dim),
            jnp.asarray(w2.T, dtype=compute_dtype),
            jnp.asarray(b2, dtype=jnp.float32).reshape(1, d_dim))


def aush_generator(x, w1_t, b1, w2_t, b2, *, tb_max=512, out_dtype=None):
    """x: [B, D] f32; w1_t: [D, H] bf16; b1: [1, H] f32; w2_t: [H, D] bf16;
    b2: [1, D] f32 (use prepare_params).  out_dtype: pass jnp.bfloat16 to halve
    the output HBM stream if downstream accepts it (default: x.dtype)."""
    B, D = x.shape
    H = w1_t.shape[1]
    out_dtype = x.dtype if out_dtype is None else out_dtype

    tb = _choose_batch_tile(B, tb_max)
    grid = (pl.cdiv(B, tb),)

    cost = pl.CostEstimate(
        flops=2 * 2 * B * D * H,                       # two matmuls
        transcendentals=B * (H + D),                   # two sigmoids
        bytes_accessed=(x.size * x.dtype.itemsize
                        + w1_t.size * w1_t.dtype.itemsize
                        + w2_t.size * w2_t.dtype.itemsize
                        + b1.size * b1.dtype.itemsize
                        + b2.size * b2.dtype.itemsize
                        + B * D * jnp.dtype(out_dtype).itemsize),
    )

    return pl.pallas_call(
        aush_generator_kernel,
        out_shape=jax.ShapeDtypeStruct((B, D), out_dtype),
        grid=grid,
        in_specs=[
            pl.BlockSpec((tb, D), lambda i: (i, 0)),   # x tile (per grid step)
            pl.BlockSpec((D, H), lambda i: (0, 0)),    # W1^T (grid-invariant)
            pl.BlockSpec((1, H), lambda i: (0, 0)),    # b1
            pl.BlockSpec((H, D), lambda i: (0, 0)),    # W2^T (grid-invariant)
            pl.BlockSpec((1, D), lambda i: (0, 0)),    # b2
        ],
        out_specs=pl.BlockSpec((tb, D), lambda i: (i, 0)),
        compiler_params=pltpu.CompilerParams(
            dimension_semantics=("parallel",)),        # shards grid over TCs (v7x)
        cost_estimate=cost,
    )(x, w1_t, b1, w2_t, b2)


def init_linear_params(key, in_dim, out_dim):
    # Mirror torch.nn.Linear default init: U(-1/sqrt(fan_in), 1/sqrt(fan_in))
    kw, kb = jax.random.split(key)
    bound = 1.0 / math.sqrt(in_dim)
    w = jax.random.uniform(kw, (out_dim, in_dim), jnp.float32, -bound, bound)
    b = jax.random.uniform(kb, (out_dim,), jnp.float32, -bound, bound)
    return w, b


def reference(x, w1, b1, w2, b2):
    h = jax.nn.sigmoid(x @ w1.T + b1)
    y = jax.nn.sigmoid(h @ w2.T + b2)
    return y * 5.0


if __name__ == "__main__":
    key = jax.random.PRNGKey(0)
    k_x, k_l1, k_l2 = jax.random.split(key, 3)

    B = 512          # batch of user rating vectors -> tb=256, grid=(2,)
    INPUT_DIM = 256  # item-vector dimension (input_dim of AushGenerator)
    HIDDEN = 128     # model-defined; 256 would fill the v6e/v7x MXU (see notes)

    x = jax.random.uniform(k_x, (B, INPUT_DIM), jnp.float32)

    w1, b1 = init_linear_params(k_l1, INPUT_DIM, HIDDEN)   # Linear(input_dim, 128)
    w2, b2 = init_linear_params(k_l2, HIDDEN, INPUT_DIM)   # Linear(128, input_dim)

    # One-time parameter preparation (transpose + dtype), off the per-call path.
    params = prepare_params(w1, b1, w2, b2)

    out = aush_generator(x, *params)          # f32 output (matches the module)
    out = jax.block_until_ready(out)

    ref = reference(x, w1, b1, w2, b2)
    assert out.shape == (B, INPUT_DIM)
    # bf16 matmul inputs with f32 accumulation -> relaxed tolerance.
    err = float(jnp.max(jnp.abs(out - ref)))
    assert jnp.allclose(out, ref, atol=5e-2, rtol=5e-2), err

    print("KERNEL_OK")
</pallas_src>

<mosaic_0001>
module attributes {stable_mosaic.version = 11 : i64} {
  func.func @aush_generator_kernel(%arg0: i32, %arg1: memref<256x256xf32, #tpu.memory_space<vmem>>, %arg2: memref<256x128xbf16, #tpu.memory_space<vmem>>, %arg3: memref<1x128xf32, #tpu.memory_space<vmem>>, %arg4: memref<128x256xbf16, #tpu.memory_space<vmem>>, %arg5: memref<1x256xf32, #tpu.memory_space<vmem>>, %arg6: memref<256x256xf32, #tpu.memory_space<vmem>>) attributes {dimension_semantics = [#tpu.dimension_semantics<parallel>], iteration_bounds = array<i64: 2>, scalar_prefetch = 0 : i64, scratch_operands = 0 : i64, tpu.core_type = #tpu.core_type<tc>, window_params = [{transform_indices = @transform_0, window_bounds = array<i64: 256, 256>}, {pipeline_mode = #tpu.pipeline_mode<synchronous>, transform_indices = @transform_1, window_bounds = array<i64: 256, 128>}, {pipeline_mode = #tpu.pipeline_mode<synchronous>, transform_indices = @transform_2, window_bounds = array<i64: 1, 128>}, {pipeline_mode = #tpu.pipeline_mode<synchronous>, transform_indices = @transform_3, window_bounds = array<i64: 128, 256>}, {pipeline_mode = #tpu.pipeline_mode<synchronous>, transform_indices = @transform_4, window_bounds = array<i64: 1, 256>}, {transform_indices = @transform_5, window_bounds = array<i64: 256, 256>}]} {
    %c0 = arith.constant 0 : index
    %c0_0 = arith.constant 0 : index
    %0 = vector.load %arg1[%c0, %c0_0] : memref<256x256xf32, #tpu.memory_space<vmem>>, vector<256x256xf32>
    %1 = arith.truncf %0 : vector<256x256xf32> to vector<256x256xbf16>
    %c0_1 = arith.constant 0 : index
    %c0_2 = arith.constant 0 : index
    %2 = vector.load %arg2[%c0_1, %c0_2] : memref<256x128xbf16, #tpu.memory_space<vmem>>, vector<256x128xbf16>
    %cst = arith.constant dense<0.000000e+00> : vector<256x128xf32>
    %3 = tpu.matmul %1, %2, %cst {dimension_numbers = #tpu.dot_dimension_numbers<[1], [0], [0], [1], [0, 0, 1, 1], [], []>} : vector<256x256xbf16>, vector<256x128xbf16>, vector<256x128xf32> -> vector<256x128xf32>
    %c0_3 = arith.constant 0 : index
    %c0_4 = arith.constant 0 : index
    %4 = vector.load %arg3[%c0_3, %c0_4] : memref<1x128xf32, #tpu.memory_space<vmem>>, vector<1x128xf32>
    %5 = vector.broadcast %4 : vector<1x128xf32> to vector<256x128xf32>
    %6 = arith.addf %3, %5 : vector<256x128xf32>
    %7 = arith.negf %6 : vector<256x128xf32>
    %8 = math.exp %7 : vector<256x128xf32>
    %cst_5 = arith.constant 1.000000e+00 : f32
    %9 = vector.broadcast %cst_5 : f32 to vector<256x128xf32>
    %10 = arith.addf %9, %8 : vector<256x128xf32>
    %11 = arith.divf %9, %10 : vector<256x128xf32>
    %12 = arith.truncf %11 : vector<256x128xf32> to vector<256x128xbf16>
    %c0_6 = arith.constant 0 : index
    %c0_7 = arith.constant 0 : index
    %13 = vector.load %arg4[%c0_6, %c0_7] : memref<128x256xbf16, #tpu.memory_space<vmem>>, vector<128x256xbf16>
    %cst_8 = arith.constant dense<0.000000e+00> : vector<256x256xf32>
    %14 = tpu.matmul %12, %13, %cst_8 {dimension_numbers = #tpu.dot_dimension_numbers<[1], [0], [0], [1], [0, 0, 1, 1], [], []>} : vector<256x128xbf16>, vector<128x256xbf16>, vector<256x256xf32> -> vector<256x256xf32>
    %c0_9 = arith.constant 0 : index
    %c0_10 = arith.constant 0 : index
    %15 = vector.load %arg5[%c0_9, %c0_10] : memref<1x256xf32, #tpu.memory_space<vmem>>, vector<1x256xf32>
    %16 = vector.broadcast %15 : vector<1x256xf32> to vector<256x256xf32>
    %17 = arith.addf %14, %16 : vector<256x256xf32>
    %18 = arith.negf %17 : vector<256x256xf32>
    %19 = math.exp %18 : vector<256x256xf32>
    %cst_11 = arith.constant 1.000000e+00 : f32
    %20 = vector.broadcast %cst_11 : f32 to vector<256x256xf32>
    %21 = arith.addf %20, %19 : vector<256x256xf32>
    %22 = arith.divf %20, %21 : vector<256x256xf32>
    %cst_12 = arith.constant 5.000000e+00 : f32
    %23 = vector.broadcast %cst_12 : f32 to vector<256x256xf32>
    %24 = arith.mulf %22, %23 : vector<256x256xf32>
    %c0_13 = arith.constant 0 : index
    %c0_14 = arith.constant 0 : index
    %25 = vector.load %arg6[%c0_13, %c0_14] : memref<256x256xf32, #tpu.memory_space<vmem>>, vector<256x256xf32>
    tpu.vector_store %arg6[%c0_13, %c0_14], %24 {strides = array<i32>} : memref<256x256xf32, #tpu.memory_space<vmem>>, vector<256x256xf32>,
    return
  }
  func.func @transform_0(%arg0: i32) -> (i32, i32) {
    %c0_i32 = arith.constant 0 : i32
    %c0_i32_0 = arith.constant 0 : i32
    return %arg0, %c0_i32 : i32, i32
  }
  func.func @transform_1(%arg0: i32) -> (i32, i32) {
    %c0_i32 = arith.constant 0 : i32
    %c0_i32_0 = arith.constant 0 : i32
    %c0_i32_1 = arith.constant 0 : i32
    return %c0_i32, %c0_i32_0 : i32, i32
  }
  func.func @transform_2(%arg0: i32) -> (i32, i32) {
    %c0_i32 = arith.constant 0 : i32
    %c0_i32_0 = arith.constant 0 : i32
    %c0_i32_1 = arith.constant 0 : i32
    return %c0_i32, %c0_i32_0 : i32, i32
  }
  func.func @transform_3(%arg0: i32) -> (i32, i32) {
    %c0_i32 = arith.constant 0 : i32
    %c0_i32_0 = arith.constant 0 : i32
    %c0_i32_1 = arith.constant 0 : i32
    return %c0_i32, %c0_i32_0 : i32, i32
  }
  func.func @transform_4(%arg0: i32) -> (i32, i32) {
    %c0_i32 = arith.constant 0 : i32
    %c0_i32_0 = arith.constant 0 : i32
    %c0_i32_1 = arith.constant 0 : i32
    return %c0_i32, %c0_i32_0 : i32, i32
  }
  func.func @transform_5(%arg0: i32) -> (i32, i32) {
    %c0_i32 = arith.constant 0 : i32
    %c0_i32_0 = arith.constant 0 : i32
    return %arg0, %c0_i32 : i32, i32
  }
}

</mosaic_0001>

<llo_original>
// kernel: tpu_custom_call.1
$region0: #{tpu_custom_call.1}
  #allocation0 [shape = 'u32[]', space=smem, size = 0x4, offset = 0x4, fixed_abs, tag = 'smem constant byte address 0x4 - core index']
  #allocation1 [shape = 'u32[72,128]{1,0:T(1,128)}', space=vmem, size = 0x9000, scoped, tag = 'internal scratch']
  %s0 = inlined_call_operand.hbm [shape: f32[512,256], index: 0, kind: input, shape index: {}]
  %s1 = inlined_call_operand.hbm [shape: bf16[256,128], index: 1, kind: input, shape index: {}]
  %s2 = inlined_call_operand.vmem [shape: f32[1,128], index: 2, kind: input, shape index: {}]
  %s3 = inlined_call_operand.hbm [shape: bf16[128,256], index: 3, kind: input, shape index: {}]
  %s4 = inlined_call_operand.vmem [shape: f32[1,256], index: 4, kind: input, shape index: {}]
  %s5 = inlined_call_operand.hbm [shape: f32[512,256], index: 5, kind: output, shape index: {}]
  %s6 = sld [smem:[#allocation0]]
  $region65: #{tpu_custom_call.1} parent=0
    _
  %s8 = ssub.s32 1, %s6
  %s9 = scalar_select 0, %s8, %s6
  $region1: #{tpu_custom_call.1} parent=0
    #allocation2 [shape = 'u8[524288]{0}', space=vmem, size = 0x80000, scoped, tag = 'input window, operand 0']
    #allocation3 [shape = 's32[2]{0}', space=sflag, size = 0x8, scoped, tag = 'scoped memory for tpu_custom_call.1']
    #allocation4 [shape = 's32[2]{0}', space=sflag, size = 0x8, scoped, tag = 'scoped memory for tpu_custom_call.1']
    #allocation5 [shape = 'u8[65536]{0}', space=vmem, size = 0x10000, scoped, tag = 'input window, operand 1, single buffered']
    #allocation6 [shape = 's32[1]{0}', space=sflag, size = 0x4, scoped, tag = 'scoped memory for tpu_custom_call.1']
    #allocation7 [shape = 'u8[65536]{0}', space=vmem, size = 0x10000, scoped, tag = 'input window, operand 3, single buffered']
    #allocation8 [shape = 'u8[524288]{0}', space=vmem, size = 0x80000, scoped, tag = 'output window, operand 0']
    %10 = vsyncpa [#allocation3], 0
    %s11 = scalar_lea.sflag [#allocation3], 1
    %12 = vsyncpa %s11, 0
    %13 = vsyncpa [#allocation6], 0
    %14 = vsyncpa [#allocation4], 0
    %s15 = scalar_lea.sflag [#allocation4], 1
    %16 = vsyncpa %s15, 0
    loop: start=0, step=1, limit=4
    $region2: #{tpu_custom_call.1} parent=1 // loop_pre_header
      _
    $region3: #{tpu_custom_call.1} parent=1 // loop_header
      %s18 = sphi 0, %s22
      %p19 = scmp.ge.s32.totalorder %s18, 4
      %s28 = sphi 0, %s30
      %s31 = sphi 0, %s28
      %s32 = sphi 0, %s31
      %s48 = sphi 0, %s32
      %s52 = sphi 0, %s52
      %s54 = sphi 0, %s52
      %s55 = sphi 0, %s54
      %s69 = sphi 0, %s55
      %s73 = sphi 0, %s73
      %s75 = sphi 0, %s73
      %s76 = sphi 0, %s75
      %s90 = sphi 0, %s76
      %s94 = sphi 0, %s94
      %s96 = sphi 0, %s94
      %s97 = sphi 0, %s96
      %s111 = sphi 0, %s97
      %s115 = sphi 0, %s115
      %s117 = sphi 0, %s115
      %s118 = sphi 0, %s117
      %s132 = sphi 0, %s118
      %s138 = sphi 0, %s140
      %s141 = sphi 0, %s138
      %s142 = sphi 0, %s141
      %s158 = sphi 0, %s142
    $region4: #{tpu_custom_call.1} parent=1 // loop_header_branch
      %21 = sbr.rel (%p19) target = $region8
    $region5: #{tpu_custom_call.1} parent=1 // loop_body
      %s23 = ssub.s32 %s18, 1
      %s24 = ssub.s32 %s18, 2
      %s25 = sadd.s32 %s18, 1
      %s26 = ssub.s32 %s18, %s25
      %p27 = scmp.eq.s32.totalorder %s26, 0
      %s29 = sadd.s32 %s28, 1
      %s30 = scalar_select %p27, %s28, %s29
      %p33 = pneg %p27
      %p34 = scmp.eq.s32.totalorder %s18, 1
      %p35 = por %p33, %p34
      %p36 = scmp.ne.s32.totalorder %s28, %s31
      %p37 = scmp.eq.s32.totalorder %s18, 0
      %p38 = por %p36, %p37
      %p39 = scmp.ne.s32.totalorder %s28, %s31
      %p40 = scmp.eq.s32.totalorder %s23, 1
      %p41 = por %p39, %p40
      %p42 = scmp.ne.s32.totalorder %s31, %s32
      %p43 = scmp.eq.s32.totalorder %s23, 0
      %p44 = por %p42, %p43
      %p45 = scmp.ne.s32.totalorder %s31, %s32
      %p46 = scmp.eq.s32.totalorder %s24, 1
      %p47 = por %p45, %p46
      %p49 = scmp.ne.s32.totalorder %s32, %s48
      %p50 = scmp.eq.s32.totalorder %s24, 0
      %p51 = por %p49, %p50
      %s53 = sadd.s32 %s52, 1
      %p56 = scmp.eq.s32.totalorder %s18, 1
      %p57 = scmp.ne.s32.totalorder %s52, %s54
      %p58 = scmp.eq.s32.totalorder %s18, 0
      %p59 = por %p57, %p58
      %p60 = scmp.ne.s32.totalorder %s52, %s54
      %p61 = scmp.eq.s32.totalorder %s23, 1
      %p62 = por %p60, %p61
      %p63 = scmp.ne.s32.totalorder %s54, %s55
      %p64 = scmp.eq.s32.totalorder %s23, 0
      %p65 = por %p63, %p64
      %p66 = scmp.ne.s32.totalorder %s54, %s55
      %p67 = scmp.eq.s32.totalorder %s24, 1
      %p68 = por %p66, %p67
      %p70 = scmp.ne.s32.totalorder %s55, %s69
      %p71 = scmp.eq.s32.totalorder %s24, 0
      %p72 = por %p70, %p71
      %s74 = sadd.s32 %s73, 1
      %p77 = scmp.eq.s32.totalorder %s18, 1
      %p78 = scmp.ne.s32.totalorder %s73, %s75
      %p79 = scmp.eq.s32.totalorder %s18, 0
      %p80 = por %p78, %p79
      %p81 = scmp.ne.s32.totalorder %s73, %s75
      %p82 = scmp.eq.s32.totalorder %s23, 1
      %p83 = por %p81, %p82
      %p84 = scmp.ne.s32.totalorder %s75, %s76
      %p85 = scmp.eq.s32.totalorder %s23, 0
      %p86 = por %p84, %p85
      %p87 = scmp.ne.s32.totalorder %s75, %s76
      %p88 = scmp.eq.s32.totalorder %s24, 1
      %p89 = por %p87, %p88
      %p91 = scmp.ne.s32.totalorder %s76, %s90
      %p92 = scmp.eq.s32.totalorder %s24, 0
      %p93 = por %p91, %p92
      %s95 = sadd.s32 %s94, 1
      %p98 = scmp.eq.s32.totalorder %s18, 1
      %p99 = scmp.ne.s32.totalorder %s94, %s96
      %p100 = scmp.eq.s32.totalorder %s18, 0
      %p101 = por %p99, %p100
      %p102 = scmp.ne.s32.totalorder %s94, %s96
      %p103 = scmp.eq.s32.totalorder %s23, 1
      %p104 = por %p102, %p103
      %p105 = scmp.ne.s32.totalorder %s96, %s97
      %p106 = scmp.eq.s32.totalorder %s23, 0
      %p107 = por %p105, %p106
      %p108 = scmp.ne.s32.totalorder %s96, %s97
      %p109 = scmp.eq.s32.totalorder %s24, 1
      %p110 = por %p108, %p109
      %p112 = scmp.ne.s32.totalorder %s97, %s111
      %p113 = scmp.eq.s32.totalorder %s24, 0
      %p114 = por %p112, %p113
      %s116 = sadd.s32 %s115, 1
      %p119 = scmp.eq.s32.totalorder %s18, 1
      %p120 = scmp.ne.s32.totalorder %s115, %s117
      %p121 = scmp.eq.s32.totalorder %s18, 0
      %p122 = por %p120, %p121
      %p123 = scmp.ne.s32.totalorder %s115, %s117
      %p124 = scmp.eq.s32.totalorder %s23, 1
      %p125 = por %p123, %p124
      %p126 = scmp.ne.s32.totalorder %s117, %s118
      %p127 = scmp.eq.s32.totalorder %s23, 0
      %p128 = por %p126, %p127
      %p129 = scmp.ne.s32.totalorder %s117, %s118
      %p130 = scmp.eq.s32.totalorder %s24, 1
      %p131 = por %p129, %p130
      %p133 = scmp.ne.s32.totalorder %s118, %s132
      %p134 = scmp.eq.s32.totalorder %s24, 0
      %p135 = por %p133, %p134
      %s136 = ssub.s32 %s18, %s25
      %p137 = scmp.eq.s32.totalorder %s136, 0
      %s139 = sadd.s32 %s138, 1
      %s140 = scalar_select %p137, %s138, %s139
      %p143 = pneg %p137
      %p144 = scmp.eq.s32.totalorder %s18, 1
      %p145 = por %p143, %p144
      %p146 = scmp.ne.s32.totalorder %s138, %s141
      %p147 = scmp.eq.s32.totalorder %s18, 0
      %p148 = por %p146, %p147
      %p149 = scmp.ne.s32.totalorder %s138, %s141
      %p150 = scmp.eq.s32.totalorder %s23, 1
      %p151 = por %p149, %p150
      %p152 = scmp.ne.s32.totalorder %s141, %s142
      %p153 = scmp.eq.s32.totalorder %s23, 0
      %p154 = por %p152, %p153
      %p155 = scmp.ne.s32.totalorder %s141, %s142
      %p156 = scmp.eq.s32.totalorder %s24, 1
      %p157 = por %p155, %p156
      %p159 = scmp.ne.s32.totalorder %s142, %s158
      %p160 = scmp.eq.s32.totalorder %s24, 0
      %p161 = por %p159, %p160
      %p162 = scmp.le.s32.totalorder 1, %s18
      %p163 = scmp.lt.s32.totalorder %s18, 3
      %p164 = pnand %p162, %p163
      %p165 = pneg %p164
      // Predicated region
      $region9: #{tpu_custom_call.1} parent=5 // pred_check
        _
      $region10: #{tpu_custom_call.1} parent=5 // pred_check_branch
        %167 = sbr.rel (%p164) target = $region12
      $region11: #{tpu_custom_call.1} parent=5 // pred_region
        %s168 = ssub.s32 %s18, 1
        // Predicated region
        $region13: #{tpu_custom_call.1} parent=11 // pred_check
          %p169 = pneg %p65
        $region14: #{tpu_custom_call.1} parent=11 // pred_check_branch
          %171 = sbr.rel (%p169) target = $region16
        $region15: #{tpu_custom_call.1} parent=11 // pred_region
          %173 = vsyncadd [#allocation6], 0
          %s174 = sshll.u32 %s1, 4
          %s175 = int_to_ptr.hbm [resolvable:$true] %s174
          %s176 = sshll.u32 [#allocation5], 4
          %s177 = int_to_ptr.vmem [resolvable:$true] %s176
          %182 = dma.hbm_to_vmem [thread:$0]  %s175, 2048, %s177, [#allocation6], 64, 64, 4
        $region16: #{tpu_custom_call.1} parent=11 // pred_fallthru
          _
        // Predicated region
        $region17: #{tpu_custom_call.1} parent=11 // pred_check
          %p183 = pneg %p86
        $region18: #{tpu_custom_call.1} parent=11 // pred_check_branch
          %185 = sbr.rel (%p183) target = $region20
        $region19: #{tpu_custom_call.1} parent=11 // pred_region
          _
        $region20: #{tpu_custom_call.1} parent=11 // pred_fallthru
          _
        // Predicated region
        $region21: #{tpu_custom_call.1} parent=11 // pred_check
          %p186 = pneg %p107
        $region22: #{tpu_custom_call.1} parent=11 // pred_check_branch
          %188 = sbr.rel (%p186) target = $region24
        $region23: #{tpu_custom_call.1} parent=11 // pred_region
          %190 = vsyncadd [#allocation6], 0
          %s191 = sshll.u32 %s3, 4
          %s192 = int_to_ptr.hbm [resolvable:$true] %s191
          %s193 = sshll.u32 [#allocation7], 4
          %s194 = int_to_ptr.vmem [resolvable:$true] %s193
          %199 = dma.hbm_to_vmem [thread:$0]  %s192, 2048, %s194, [#allocation6], 128, 128, 8
        $region24: #{tpu_custom_call.1} parent=11 // pred_fallthru
          _
        // Predicated region
        $region25: #{tpu_custom_call.1} parent=11 // pred_check
          %p200 = pneg %p128
        $region26: #{tpu_custom_call.1} parent=11 // pred_check_branch
          %202 = sbr.rel (%p200) target = $region28
        $region27: #{tpu_custom_call.1} parent=11 // pred_region
          _
        $region28: #{tpu_custom_call.1} parent=11 // pred_fallthru
          _
      $region12: #{tpu_custom_call.1} parent=5 // pred_fallthru
        _
      %p203 = scmp.lt.s32.totalorder %s18, 2
      // Predicated region
      $region29: #{tpu_custom_call.1} parent=5 // pred_check
        %p204 = pneg %p203
      $region30: #{tpu_custom_call.1} parent=5 // pred_check_branch
        %206 = sbr.rel (%p204) target = $region32
      $region31: #{tpu_custom_call.1} parent=5 // pred_region
        // Predicated region
        $region33: #{tpu_custom_call.1} parent=31 // pred_check
          %p207 = pneg %p38
        $region34: #{tpu_custom_call.1} parent=31 // pred_check_branch
          %209 = sbr.rel (%p207) target = $region36
        $region35: #{tpu_custom_call.1} parent=31 // pred_region
          %s210 = sand.u32 %s28, 1
          %s211 = scalar_lea.sflag [#allocation3], %s210
          %s212 = sand.u32 %s28, 1
          %s213 = smul.addr %s212, 512
          %s214 = scalar_lea.vmem [#allocation2], %s213
          %s215 = smul.u32 32, %s18
          %217 = vsyncadd %s211, 0
          %s218 = smul.addr %s215, 2
          %s219 = smul.addr %s218, 8
          %s220 = scalar_lea.hbm %s0, %s219
          %s221 = sshll.u32 %s220, 4
          %s222 = int_to_ptr.hbm [resolvable:$true] %s221
          %s223 = sshll.u32 %s214, 4
          %s224 = int_to_ptr.vmem [resolvable:$true] %s223
          %229 = dma.hbm_to_vmem [thread:$0]  %s222, 8192, %s224, %s211, 256, 256, 16
        $region36: #{tpu_custom_call.1} parent=31 // pred_fallthru
          _
      $region32: #{tpu_custom_call.1} parent=5 // pred_fallthru
        _
      %p230 = scmp.le.s32.totalorder 1, %s18
      %p231 = scmp.lt.s32.totalorder %s18, 3
      %p232 = pnand %p230, %p231
      %p233 = pneg %p232
      // Predicated region
      $region37: #{tpu_custom_call.1} parent=5 // pred_check
        _
      $region38: #{tpu_custom_call.1} parent=5 // pred_check_branch
        %235 = sbr.rel (%p232) target = $region40
      $region39: #{tpu_custom_call.1} parent=5 // pred_region
        %s236 = ssub.s32 %s18, 1
        %s237 = sand.u32 %s31, 1
        %s238 = scalar_lea.sflag [#allocation3], %s237
        %s239 = sand.u32 %s31, 1
        %s240 = smul.addr %s239, 512
        %s241 = scalar_lea.vmem [#allocation2], %s240
        // Predicated region
        $region41: #{tpu_custom_call.1} parent=39 // pred_check
          %p242 = pneg %p44
        $region42: #{tpu_custom_call.1} parent=39 // pred_check_branch
          %244 = sbr.rel (%p242) target = $region44
        $region43: #{tpu_custom_call.1} parent=39 // pred_region
          %246 = dma.done %s238, 8192
        $region44: #{tpu_custom_call.1} parent=39 // pred_fallthru
          _
        // Predicated region
        $region45: #{tpu_custom_call.1} parent=39 // pred_check
          %p247 = pneg %p65
        $region46: #{tpu_custom_call.1} parent=39 // pred_check_branch
          %249 = sbr.rel (%p247) target = $region48
        $region47: #{tpu_custom_call.1} parent=39 // pred_region
          %251 = dma.done [#allocation6], 2048
        $region48: #{tpu_custom_call.1} parent=39 // pred_fallthru
          _
        // Predicated region
        $region49: #{tpu_custom_call.1} parent=39 // pred_check
          %p252 = pneg %p107
        $region50: #{tpu_custom_call.1} parent=39 // pred_check_branch
          %254 = sbr.rel (%p252) target = $region52
        $region51: #{tpu_custom_call.1} parent=39 // pred_region
          %256 = dma.done [#allocation6], 2048
        $region52: #{tpu_custom_call.1} parent=39 // pred_fallthru
          _
        %s257 = sand.u32 %s31, 1
        %s258 = scalar_lea.sflag [#allocation3], %s257
        %s259 = sand.u32 %s31, 1
        %s260 = smul.addr %s259, 512
        %s261 = scalar_lea.vmem [#allocation2], %s260
        %p262 = pneg %p44
        %p263 = pneg %p41
        %p264 = pneg %p65
        %p265 = pneg %p62
        %p266 = pneg %p86
        %p267 = pneg %p83
        %p268 = pneg %p107
        %p269 = pneg %p104
        %p270 = pneg %p128
        %p271 = pneg %p125
        %p272 = pneg %p154
        %p273 = pneg %p151
        %s274 = sand.u32 %s141, 1
        %s275 = scalar_lea.sflag [#allocation4], %s274
        %s276 = sand.u32 %s141, 1
        %s277 = smul.addr %s276, 512
        %s278 = scalar_lea.vmem [#allocation8], %s277
        %s279 = smul.u32 32, %s23
        %s280 = smul.u32 32, %s23
        %v281 = vld [vmem:[%s241] sm:$0xff]
        %v282 = vld [vmem:[%s241 + $0x8] sm:$0xff]
        %v283 = vld [vmem:[%s241 + $0x10] sm:$0xff]
        %v284 = vld [vmem:[%s241 + $0x18] sm:$0xff]
        %v285 = vld [vmem:[%s241 + $0x20] sm:$0xff]
        %v286 = vld [vmem:[%s241 + $0x28] sm:$0xff]
        %v287 = vld [vmem:[%s241 + $0x30] sm:$0xff]
        %v288 = vld [vmem:[%s241 + $0x38] sm:$0xff]
        %v289 = vld [vmem:[%s241 + $0x40] sm:$0xff]
        %v290 = vld [vmem:[%s241 + $0x48] sm:$0xff]
        %v291 = vld [vmem:[%s241 + $0x50] sm:$0xff]
        %v292 = vld [vmem:[%s241 + $0x58] sm:$0xff]
        %v293 = vld [vmem:[%s241 + $0x60] sm:$0xff]
        %v294 = vld [vmem:[%s241 + $0x68] sm:$0xff]
        %v295 = vld [vmem:[%s241 + $0x70] sm:$0xff]
        %v296 = vld [vmem:[%s241 + $0x78] sm:$0xff]
        %v297 = vld [vmem:[%s241 + $0x80] sm:$0xff]
        %v298 = vld [vmem:[%s241 + $0x88] sm:$0xff]
        %v299 = vld [vmem:[%s241 + $0x90] sm:$0xff]
        %v300 = vld [vmem:[%s241 + $0x98] sm:$0xff]
        %v301 = vld [vmem:[%s241 + $0xa0] sm:$0xff]
        %v302 = vld [vmem:[%s241 + $0xa8] sm:$0xff]
        %v303 = vld [vmem:[%s241 + $0xb0] sm:$0xff]
        %v304 = vld [vmem:[%s241 + $0xb8] sm:$0xff]
        %v305 = vld [vmem:[%s241 + $0xc0] sm:$0xff]
        %v306 = vld [vmem:[%s241 + $0xc8] sm:$0xff]
        %v307 = vld [vmem:[%s241 + $0xd0] sm:$0xff]
        %v308 = vld [vmem:[%s241 + $0xd8] sm:$0xff]
        %v309 = vld [vmem:[%s241 + $0xe0] sm:$0xff]
        %v310 = vld [vmem:[%s241 + $0xe8] sm:$0xff]
        %v311 = vld [vmem:[%s241 + $0xf0] sm:$0xff]
        %v312 = vld [vmem:[%s241 + $0xf8] sm:$0xff]
        %v313 = vld [vmem:[%s241 + $0x100] sm:$0xff]
        %v314 = vld [vmem:[%s241 + $0x108] sm:$0xff]
        %v315 = vld [vmem:[%s241 + $0x110] sm:$0xff]
        %v316 = vld [vmem:[%s241 + $0x118] sm:$0xff]
        %v317 = vld [vmem:[%s241 + $0x120] sm:$0xff]
        %v318 = vld [vmem:[%s241 + $0x128] sm:$0xff]
        %v319 = vld [vmem:[%s241 + $0x130] sm:$0xff]
        %v320 = vld [vmem:[%s241 + $0x138] sm:$0xff]
        %v321 = vld [vmem:[%s241 + $0x140] sm:$0xff]
        %v322 = vld [vmem:[%s241 + $0x148] sm:$0xff]
        %v323 = vld [vmem:[%s241 + $0x150] sm:$0xff]
        %v324 = vld [vmem:[%s241 + $0x158] sm:$0xff]
        %v325 = vld [vmem:[%s241 + $0x160] sm:$0xff]
        %v326 = vld [vmem:[%s241 + $0x168] sm:$0xff]
        %v327 = vld [vmem:[%s241 + $0x170] sm:$0xff]
        %v328 = vld [vmem:[%s241 + $0x178] sm:$0xff]
        %v329 = vld [vmem:[%s241 + $0x180] sm:$0xff]
        %v330 = vld [vmem:[%s241 + $0x188] sm:$0xff]
        %v331 = vld [vmem:[%s241 + $0x190] sm:$0xff]
        %v332 = vld [vmem:[%s241 + $0x198] sm:$0xff]
        %v333 = vld [vmem:[%s241 + $0x1a0] sm:$0xff]
        %v334 = vld [vmem:[%s241 + $0x1a8] sm:$0xff]
        %v335 = vld [vmem:[%s241 + $0x1b0] sm:$0xff]
        %v336 = vld [vmem:[%s241 + $0x1b8] sm:$0xff]
        %v337 = vld [vmem:[%s241 + $0x1c0] sm:$0xff]
        %v338 = vld [vmem:[%s241 + $0x1c8] sm:$0xff]
        %v339 = vld [vmem:[%s241 + $0x1d0] sm:$0xff]
        %v340 = vld [vmem:[%s241 + $0x1d8] sm:$0xff]
        %v341 = vld [vmem:[%s241 + $0x1e0] sm:$0xff]
        %v342 = vld [vmem:[%s241 + $0x1e8] sm:$0xff]
        %v343 = vld [vmem:[%s241 + $0x1f0] sm:$0xff]
        %v344 = vld [vmem:[%s241 + $0x1f8] sm:$0xff]
        %v345 = vpack.c.bf16 %v283, %v281
        %v346 = vpack.c.bf16 %v284, %v282
        %v347 = vpack.c.bf16 %v287, %v285
        %v348 = vpack.c.bf16 %v288, %v286
        %v349 = vpack.c.bf16 %v291, %v289
        %v350 = vpack.c.bf16 %v292, %v290
        %v351 = vpack.c.bf16 %v295, %v293
        %v352 = vpack.c.bf16 %v296, %v294
        %v353 = vpack.c.bf16 %v299, %v297
        %v354 = vpack.c.bf16 %v300, %v298
        %v355 = vpack.c.bf16 %v303, %v301
        %v356 = vpack.c.bf16 %v304, %v302
        %v357 = vpack.c.bf16 %v307, %v305
        %v358 = vpack.c.bf16 %v308, %v306
        %v359 = vpack.c.bf16 %v311, %v309
        %v360 = vpack.c.bf16 %v312, %v310
        %v361 = vpack.c.bf16 %v315, %v313
        %v362 = vpack.c.bf16 %v316, %v314
        %v363 = vpack.c.bf16 %v319, %v317
        %v364 = vpack.c.bf16 %v320, %v318
        %v365 = vpack.c.bf16 %v323, %v321
        %v366 = vpack.c.bf16 %v324, %v322
        %v367 = vpack.c.bf16 %v327, %v325
        %v368 = vpack.c.bf16 %v328, %v326
        %v369 = vpack.c.bf16 %v331, %v329
        %v370 = vpack.c.bf16 %v332, %v330
        %v371 = vpack.c.bf16 %v335, %v333
        %v372 = vpack.c.bf16 %v336, %v334
        %v373 = vpack.c.bf16 %v339, %v337
        %v374 = vpack.c.bf16 %v340, %v338
        %v375 = vpack.c.bf16 %v343, %v341
        %v376 = vpack.c.bf16 %v344, %v342
        %v377 = vld [vmem:[#allocation5] sm:$0xf]
        %v378 = vld [vmem:[#allocation5 + $0x4] sm:$0xf]
        %v379 = vld [vmem:[#allocation5 + $0x8] sm:$0xf]
        %v380 = vld [vmem:[#allocation5 + $0xc] sm:$0xf]
        %v381 = vld [vmem:[#allocation5 + $0x10] sm:$0xf]
        %v382 = vld [vmem:[#allocation5 + $0x14] sm:$0xf]
        %v383 = vld [vmem:[#allocation5 + $0x18] sm:$0xf]
        %v384 = vld [vmem:[#allocation5 + $0x1c] sm:$0xf]
        %v385 = vld [vmem:[#allocation5 + $0x20] sm:$0xf]
        %v386 = vld [vmem:[#allocation5 + $0x24] sm:$0xf]
        %v387 = vld [vmem:[#allocation5 + $0x28] sm:$0xf]
        %v388 = vld [vmem:[#allocation5 + $0x2c] sm:$0xf]
        %v389 = vld [vmem:[#allocation5 + $0x30] sm:$0xf]
        %v390 = vld [vmem:[#allocation5 + $0x34] sm:$0xf]
        %v391 = vld [vmem:[#allocation5 + $0x38] sm:$0xf]
        %v392 = vld [vmem:[#allocation5 + $0x3c] sm:$0xf]
        %v393 = vld [vmem:[#allocation5 + $0x40] sm:$0xf]
        %v394 = vld [vmem:[#allocation5 + $0x44] sm:$0xf]
        %v395 = vld [vmem:[#allocation5 + $0x48] sm:$0xf]
        %v396 = vld [vmem:[#allocation5 + $0x4c] sm:$0xf]
        %v397 = vld [vmem:[#allocation5 + $0x50] sm:$0xf]
        %v398 = vld [vmem:[#allocation5 + $0x54] sm:$0xf]
        %v399 = vld [vmem:[#allocation5 + $0x58] sm:$0xf]
        %v400 = vld [vmem:[#allocation5 + $0x5c] sm:$0xf]
        %v401 = vld [vmem:[#allocation5 + $0x60] sm:$0xf]
        %v402 = vld [vmem:[#allocation5 + $0x64] sm:$0xf]
        %v403 = vld [vmem:[#allocation5 + $0x68] sm:$0xf]
        %v404 = vld [vmem:[#allocation5 + $0x6c] sm:$0xf]
        %v405 = vld [vmem:[#allocation5 + $0x70] sm:$0xf]
        %v406 = vld [vmem:[#allocation5 + $0x74] sm:$0xf]
        %v407 = vld [vmem:[#allocation5 + $0x78] sm:$0xf]
        %v408 = vld [vmem:[#allocation5 + $0x7c] sm:$0xf]
        %v409 = vld [vmem:[%s2] sm:$0x1]
        %v411 = vperm.slane %v409, 0
        %v445 = vunpack.c.l.b16 %v377
        %v446 = vunpack.c.l.b16 %v378
        %v447 = vunpack.c.l.b16 %v379
        %v448 = vunpack.c.l.b16 %v380
        %v449 = vunpack.c.l.b16 %v381
        %v450 = vunpack.c.l.b16 %v382
        %v451 = vunpack.c.l.b16 %v383
        %v452 = vunpack.c.l.b16 %v384
        %v453 = vunpack.c.l.b16 %v385
        %v454 = vunpack.c.l.b16 %v386
        %v455 = vunpack.c.l.b16 %v387
        %v456 = vunpack.c.l.b16 %v388
        %v457 = vunpack.c.l.b16 %v389
        %v458 = vunpack.c.l.b16 %v390
        %v459 = vunpack.c.l.b16 %v391
        %v460 = vunpack.c.l.b16 %v392
        %v461 = vunpack.c.l.b16 %v393
        %v462 = vunpack.c.l.b16 %v394
        %v463 = vunpack.c.l.b16 %v395
        %v464 = vunpack.c.l.b16 %v396
        %v465 = vunpack.c.l.b16 %v397
        %v466 = vunpack.c.l.b16 %v398
        %v467 = vunpack.c.l.b16 %v399
        %v468 = vunpack.c.l.b16 %v400
        %v469 = vunpack.c.l.b16 %v401
        %v470 = vunpack.c.l.b16 %v402
        %v471 = vunpack.c.l.b16 %v403
        %v472 = vunpack.c.l.b16 %v404
        %v473 = vunpack.c.l.b16 %v405
        %v474 = vunpack.c.l.b16 %v406
        %v475 = vunpack.c.l.b16 %v407
        %v476 = vunpack.c.l.b16 %v408
        %v477 = vpack.c.b16 %v446, %v445
        %v478 = vpack.c.b16 %v448, %v447
        %v479 = vpack.c.b16 %v450, %v449
        %v480 = vpack.c.b16 %v452, %v451
        %v481 = vpack.c.b16 %v454, %v453
        %v482 = vpack.c.b16 %v456, %v455
        %v483 = vpack.c.b16 %v458, %v457
        %v484 = vpack.c.b16 %v460, %v459
        %v485 = vpack.c.b16 %v462, %v461
        %v486 = vpack.c.b16 %v464, %v463
        %v487 = vpack.c.b16 %v466, %v465
        %v488 = vpack.c.b16 %v468, %v467
        %v489 = vpack.c.b16 %v470, %v469
        %v490 = vpack.c.b16 %v472, %v471
        %v491 = vpack.c.b16 %v474, %v473
        %v492 = vpack.c.b16 %v476, %v475
        %509 = vmatpush.bf16.msra.mxu0 %v484
        %510 = vmatpush.bf16.msra.mxu0 %v483
        %511 = vmatpush.bf16.msra.mxu0 %v482
        %512 = vmatpush.bf16.msra.mxu0 %v481
        %513 = vmatpush.bf16.msra.mxu0 %v480
        %514 = vmatpush.bf16.msra.mxu0 %v479
        %515 = vmatpush.bf16.msra.mxu0 %v478
        %516 = vmatpush.bf16.msra.mxu0 %v477
        %517 = vmatmul.bf16.gmra.mxu0 %v345
        %v518 = vpop.f32.mrf.mxu0
        %v519 = vadd.f32 %v411, %v518
        %v520 = vpop.f32.mrf.mxu0
        %v521 = vadd.f32 %v411, %v520
        %522 = vmatmul.bf16.gmra.mxu0 %v347
        %v523 = vpop.f32.mrf.mxu0
        %v524 = vadd.f32 %v411, %v523
        %v525 = vpop.f32.mrf.mxu0
        %v526 = vadd.f32 %v411, %v525
        %527 = vmatmul.bf16.gmra.mxu0 %v349
        %v528 = vpop.f32.mrf.mxu0
        %v529 = vadd.f32 %v411, %v528
        %v530 = vpop.f32.mrf.mxu0
        %v531 = vadd.f32 %v411, %v530
        %532 = vmatmul.bf16.gmra.mxu0 %v351
        %v533 = vpop.f32.mrf.mxu0
        %v534 = vadd.f32 %v411, %v533
        %v535 = vpop.f32.mrf.mxu0
        %v536 = vadd.f32 %v411, %v535
        %537 = vmatmul.bf16.gmra.mxu0 %v353
        %v538 = vpop.f32.mrf.mxu0
        %v539 = vadd.f32 %v411, %v538
        %v540 = vpop.f32.mrf.mxu0
        %v541 = vadd.f32 %v411, %v540
        %542 = vmatmul.bf16.gmra.mxu0 %v355
        %v543 = vpop.f32.mrf.mxu0
        %v544 = vadd.f32 %v411, %v543
        %v545 = vpop.f32.mrf.mxu0
        %v546 = vadd.f32 %v411, %v545
        %547 = vmatmul.bf16.gmra.mxu0 %v357
        %v548 = vpop.f32.mrf.mxu0
        %v549 = vadd.f32 %v411, %v548
        %v550 = vpop.f32.mrf.mxu0
        %v551 = vadd.f32 %v411, %v550
        %552 = vmatmul.bf16.gmra.mxu0 %v359
        %v553 = vpop.f32.mrf.mxu0
        %v554 = vadd.f32 %v411, %v553
        %v555 = vpop.f32.mrf.mxu0
        %v556 = vadd.f32 %v411, %v555
        %557 = vmatmul.bf16.gmra.mxu0 %v361
        %v558 = vpop.f32.mrf.mxu0
        %v559 = vadd.f32 %v411, %v558
        %v560 = vpop.f32.mrf.mxu0
        %v561 = vadd.f32 %v411, %v560
        %562 = vmatmul.bf16.gmra.mxu0 %v363
        %v563 = vpop.f32.mrf.mxu0
        %v564 = vadd.f32 %v411, %v563
        %v565 = vpop.f32.mrf.mxu0
        %v566 = vadd.f32 %v411, %v565
        %567 = vmatmul.bf16.gmra.mxu0 %v365
        %v568 = vpop.f32.mrf.mxu0
        %v569 = vadd.f32 %v411, %v568
        %v570 = vpop.f32.mrf.mxu0
        %v571 = vadd.f32 %v411, %v570
        %572 = vmatmul.bf16.gmra.mxu0 %v367
        %v573 = vpop.f32.mrf.mxu0
        %v574 = vadd.f32 %v411, %v573
        %v575 = vpop.f32.mrf.mxu0
        %v576 = vadd.f32 %v411, %v575
        %577 = vmatmul.bf16.gmra.mxu0 %v369
        %v578 = vpop.f32.mrf.mxu0
        %v579 = vadd.f32 %v411, %v578
        %v580 = vpop.f32.mrf.mxu0
        %v581 = vadd.f32 %v411, %v580
        %582 = vmatmul.bf16.gmra.mxu0 %v371
        %v583 = vpop.f32.mrf.mxu0
        %v584 = vadd.f32 %v411, %v583
        %v585 = vpop.f32.mrf.mxu0
        %v586 = vadd.f32 %v411, %v585
        %587 = vmatmul.bf16.gmra.mxu0 %v373
        %v588 = vpop.f32.mrf.mxu0
        %v589 = vadd.f32 %v411, %v588
        %v590 = vpop.f32.mrf.mxu0
        %v591 = vadd.f32 %v411, %v590
        %592 = vmatmul.bf16.gmra.mxu0 %v375
        %v593 = vpop.f32.mrf.mxu0
        %v594 = vadd.f32 %v411, %v593
        %v595 = vpop.f32.mrf.mxu0
        %v596 = vadd.f32 %v411, %v595
        %597 = vdwg.mxu0
        %598 = vmatpush.bf16.msra.mxu0 %v492
        %599 = vmatpush.bf16.msra.mxu0 %v491
        %600 = vmatpush.bf16.msra.mxu0 %v490
        %601 = vmatpush.bf16.msra.mxu0 %v489
        %602 = vmatpush.bf16.msra.mxu0 %v488
        %603 = vmatpush.bf16.msra.mxu0 %v487
        %604 = vmatpush.bf16.msra.mxu0 %v486
        %605 = vmatpush.bf16.msra.mxu0 %v485
        %606 = vmatmul.bf16.gmra.mxu0 %v346
        %v607 = vpop.f32.mrf.mxu0
        %v608 = vadd.f32 %v519, %v607
        %v609 = vpop.f32.mrf.mxu0
        %v610 = vadd.f32 %v521, %v609
        %611 = vmatmul.bf16.gmra.mxu0 %v348
        %v612 = vpop.f32.mrf.mxu0
        %v613 = vadd.f32 %v524, %v612
        %v614 = vpop.f32.mrf.mxu0
        %v615 = vadd.f32 %v526, %v614
        %616 = vmatmul.bf16.gmra.mxu0 %v350
        %v617 = vpop.f32.mrf.mxu0
        %v618 = vadd.f32 %v529, %v617
        %v619 = vpop.f32.mrf.mxu0
        %v620 = vadd.f32 %v531, %v619
        %621 = vmatmul.bf16.gmra.mxu0 %v352
        %v622 = vpop.f32.mrf.mxu0
        %v623 = vadd.f32 %v534, %v622
        %v624 = vpop.f32.mrf.mxu0
        %v625 = vadd.f32 %v536, %v624
        %626 = vmatmul.bf16.gmra.mxu0 %v354
        %v627 = vpop.f32.mrf.mxu0
        %v628 = vadd.f32 %v539, %v627
        %v629 = vpop.f32.mrf.mxu0
        %v630 = vadd.f32 %v541, %v629
        %631 = vmatmul.bf16.gmra.mxu0 %v356
        %v632 = vpop.f32.mrf.mxu0
        %v633 = vadd.f32 %v544, %v632
        %v634 = vpop.f32.mrf.mxu0
        %v635 = vadd.f32 %v546, %v634
        %636 = vmatmul.bf16.gmra.mxu0 %v358
        %v637 = vpop.f32.mrf.mxu0
        %v638 = vadd.f32 %v549, %v637
        %v639 = vpop.f32.mrf.mxu0
        %v640 = vadd.f32 %v551, %v639
        %641 = vmatmul.bf16.gmra.mxu0 %v360
        %v642 = vpop.f32.mrf.mxu0
        %v643 = vadd.f32 %v554, %v642
        %v644 = vpop.f32.mrf.mxu0
        %v645 = vadd.f32 %v556, %v644
        %646 = vmatmul.bf16.gmra.mxu0 %v362
        %v647 = vpop.f32.mrf.mxu0
        %v648 = vadd.f32 %v559, %v647
        %v649 = vpop.f32.mrf.mxu0
        %v650 = vadd.f32 %v561, %v649
        %651 = vmatmul.bf16.gmra.mxu0 %v364
        %v652 = vpop.f32.mrf.mxu0
        %v653 = vadd.f32 %v564, %v652
        %v654 = vpop.f32.mrf.mxu0
        %v655 = vadd.f32 %v566, %v654
        %656 = vmatmul.bf16.gmra.mxu0 %v366
        %v657 = vpop.f32.mrf.mxu0
        %v658 = vadd.f32 %v569, %v657
        %v659 = vpop.f32.mrf.mxu0
        %v660 = vadd.f32 %v571, %v659
        %661 = vmatmul.bf16.gmra.mxu0 %v368
        %v662 = vpop.f32.mrf.mxu0
        %v663 = vadd.f32 %v574, %v662
        %v664 = vpop.f32.mrf.mxu0
        %v665 = vadd.f32 %v576, %v664
        %666 = vmatmul.bf16.gmra.mxu0 %v370
        %v667 = vpop.f32.mrf.mxu0
        %v668 = vadd.f32 %v579, %v667
        %v669 = vpop.f32.mrf.mxu0
        %v670 = vadd.f32 %v581, %v669
        %671 = vmatmul.bf16.gmra.mxu0 %v372
        %v672 = vpop.f32.mrf.mxu0
        %v673 = vadd.f32 %v584, %v672
        %v674 = vpop.f32.mrf.mxu0
        %v675 = vadd.f32 %v586, %v674
        %676 = vmatmul.bf16.gmra.mxu0 %v374
        %v677 = vpop.f32.mrf.mxu0
        %v678 = vadd.f32 %v589, %v677
        %v679 = vpop.f32.mrf.mxu0
        %v680 = vadd.f32 %v591, %v679
        %681 = vmatmul.bf16.gmra.mxu0 %v376
        %v682 = vpop.f32.mrf.mxu0
        %v683 = vadd.f32 %v594, %v682
        %v684 = vpop.f32.mrf.mxu0
        %v685 = vadd.f32 %v596, %v684
        %686 = vdwg.mxu0
        %v687 = vxor.u32 %v608, 2147483648
        %v688 = vxor.u32 %v610, 2147483648
        %v689 = vxor.u32 %v613, 2147483648
        %v690 = vxor.u32 %v615, 2147483648
        %v691 = vxor.u32 %v618, 2147483648
        %v692 = vxor.u32 %v620, 2147483648
        %v693 = vxor.u32 %v623, 2147483648
        %v694 = vxor.u32 %v625, 2147483648
        %v695 = vxor.u32 %v628, 2147483648
        %v696 = vxor.u32 %v630, 2147483648
        %v697 = vxor.u32 %v633, 2147483648
        %v698 = vxor.u32 %v635, 2147483648
        %v699 = vxor.u32 %v638, 2147483648
        %v700 = vxor.u32 %v640, 2147483648
        %v701 = vxor.u32 %v643, 2147483648
        %v702 = vxor.u32 %v645, 2147483648
        %v703 = vxor.u32 %v648, 2147483648
        %v704 = vxor.u32 %v650, 2147483648
        %v705 = vxor.u32 %v653, 2147483648
        %v706 = vxor.u32 %v655, 2147483648
        %v707 = vxor.u32 %v658, 2147483648
        %v708 = vxor.u32 %v660, 2147483648
        %v709 = vxor.u32 %v663, 2147483648
        %v710 = vxor.u32 %v665, 2147483648
        %v711 = vxor.u32 %v668, 2147483648
        %v712 = vxor.u32 %v670, 2147483648
        %v713 = vxor.u32 %v673, 2147483648
        %v714 = vxor.u32 %v675, 2147483648
        %v715 = vxor.u32 %v678, 2147483648
        %v716 = vxor.u32 %v680, 2147483648
        %v717 = vxor.u32 %v683, 2147483648
        %v718 = vxor.u32 %v685, 2147483648
        %v719 = vmul.f32 %v687, 1.442695
        %v720 = vpow.pop %v719
        %v721 = vmul.f32 %v688, 1.442695
        %v722 = vpow.pop %v721
        %v723 = vmul.f32 %v689, 1.442695
        %v724 = vpow.pop %v723
        %v725 = vmul.f32 %v690, 1.442695
        %v726 = vpow.pop %v725
        %v727 = vmul.f32 %v691, 1.442695
        %v728 = vpow.pop %v727
        %v729 = vmul.f32 %v692, 1.442695
        %v730 = vpow.pop %v729
        %v731 = vmul.f32 %v693, 1.442695
        %v732 = vpow.pop %v731
        %v733 = vmul.f32 %v694, 1.442695
        %v734 = vpow.pop %v733
        %v735 = vmul.f32 %v695, 1.442695
        %v736 = vpow.pop %v735
        %v737 = vmul.f32 %v696, 1.442695
        %v738 = vpow.pop %v737
        %v739 = vmul.f32 %v697, 1.442695
        %v740 = vpow.pop %v739
        %v741 = vmul.f32 %v698, 1.442695
        %v742 = vpow.pop %v741
        %v743 = vmul.f32 %v699, 1.442695
        %v744 = vpow.pop %v743
        %v745 = vmul.f32 %v700, 1.442695
        %v746 = vpow.pop %v745
        %v747 = vmul.f32 %v701, 1.442695
        %v748 = vpow.pop %v747
        %v749 = vmul.f32 %v702, 1.442695
        %v750 = vpow.pop %v749
        %v751 = vmul.f32 %v703, 1.442695
        %v752 = vpow.pop %v751
        %v753 = vmul.f32 %v704, 1.442695
        %v754 = vpow.pop %v753
        %v755 = vmul.f32 %v705, 1.442695
        %v756 = vpow.pop %v755
        %v757 = vmul.f32 %v706, 1.442695
        %v758 = vpow.pop %v757
        %v759 = vmul.f32 %v707, 1.442695
        %v760 = vpow.pop %v759
        %v761 = vmul.f32 %v708, 1.442695
        %v762 = vpow.pop %v761
        %v763 = vmul.f32 %v709, 1.442695
        %v764 = vpow.pop %v763
        %v765 = vmul.f32 %v710, 1.442695
        %v766 = vpow.pop %v765
        %v767 = vmul.f32 %v711, 1.442695
        %v768 = vpow.pop %v767
        %v769 = vmul.f32 %v712, 1.442695
        %v770 = vpow.pop %v769
        %v771 = vmul.f32 %v713, 1.442695
        %v772 = vpow.pop %v771
        %v773 = vmul.f32 %v714, 1.442695
        %v774 = vpow.pop %v773
        %v775 = vmul.f32 %v715, 1.442695
        %v776 = vpow.pop %v775
        %v777 = vmul.f32 %v716, 1.442695
        %v778 = vpow.pop %v777
        %v779 = vmul.f32 %v717, 1.442695
        %v780 = vpow.pop %v779
        %v781 = vmul.f32 %v718, 1.442695
        %v782 = vpow.pop %v781
        %v783 = vadd.f32 %v720, 1.0
        %v784 = vadd.f32 %v722, 1.0
        %v785 = vadd.f32 %v724, 1.0
        %v786 = vadd.f32 %v726, 1.0
        %v787 = vadd.f32 %v728, 1.0
        %v788 = vadd.f32 %v730, 1.0
        %v789 = vadd.f32 %v732, 1.0
        %v790 = vadd.f32 %v734, 1.0
        %v791 = vadd.f32 %v736, 1.0
        %v792 = vadd.f32 %v738, 1.0
        %v793 = vadd.f32 %v740, 1.0
        %v794 = vadd.f32 %v742, 1.0
        %v795 = vadd.f32 %v744, 1.0
        %v796 = vadd.f32 %v746, 1.0
        %v797 = vadd.f32 %v748, 1.0
        %v798 = vadd.f32 %v750, 1.0
        %v799 = vadd.f32 %v752, 1.0
        %v800 = vadd.f32 %v754, 1.0
        %v801 = vadd.f32 %v756, 1.0
        %v802 = vadd.f32 %v758, 1.0
        %v803 = vadd.f32 %v760, 1.0
        %v804 = vadd.f32 %v762, 1.0
        %v805 = vadd.f32 %v764, 1.0
        %v806 = vadd.f32 %v766, 1.0
        %v807 = vadd.f32 %v768, 1.0
        %v808 = vadd.f32 %v770, 1.0
        %v809 = vadd.f32 %v772, 1.0
        %v810 = vadd.f32 %v774, 1.0
        %v811 = vadd.f32 %v776, 1.0
        %v812 = vadd.f32 %v778, 1.0
        %v813 = vadd.f32 %v780, 1.0
        %v814 = vadd.f32 %v782, 1.0
        %v815 = vrcp.pop %v783
        %v816 = vmul.f32 %v783, %v815
        %v817 = vsub.f32 1.0, %v816
        %v818 = vmul.f32 %v815, %v817
        %v819 = vadd.f32 %v815, %v818
        %vm820 = vweird.f32 %v783
        %vm821 = vweird.f32 %v815
        %vm822 = vmor %vm820, %vm821
        %v823 = vsel %vm822, %v815, %v819
        %v824 = vand.u32 2147483647, %v783
        %vm825 = vcmp.eq.f32.partialorder %v824, 8.507059e+37
        %v826 = vand.u32 %v783, 2147483648
        %v827 = vor.u32 1.1754944e-38, %v826
        %v828 = vsel %vm825, %v827, %v823
        %v829 = vmul.f32 1.0, %v828
        %v830 = vrcp.pop %v784
        %v831 = vmul.f32 %v784, %v830
        %v832 = vsub.f32 1.0, %v831
        %v833 = vmul.f32 %v830, %v832
        %v834 = vadd.f32 %v830, %v833
        %vm835 = vweird.f32 %v784
        %vm836 = vweird.f32 %v830
        %vm837 = vmor %vm835, %vm836
        %v838 = vsel %vm837, %v830, %v834
        %v839 = vand.u32 2147483647, %v784
        %vm840 = vcmp.eq.f32.partialorder %v839, 8.507059e+37
        %v841 = vand.u32 %v784, 2147483648
        %v842 = vor.u32 1.1754944e-38, %v841
        %v843 = vsel %vm840, %v842, %v838
        %v844 = vmul.f32 1.0, %v843
        %v845 = vrcp.pop %v785
        %v846 = vmul.f32 %v785, %v845
        %v847 = vsub.f32 1.0, %v846
        %v848 = vmul.f32 %v845, %v847
        %v849 = vadd.f32 %v845, %v848
        %vm850 = vweird.f32 %v785
        %vm851 = vweird.f32 %v845
        %vm852 = vmor %vm850, %vm851
        %v853 = vsel %vm852, %v845, %v849
        %v854 = vand.u32 2147483647, %v785
        %vm855 = vcmp.eq.f32.partialorder %v854, 8.507059e+37
        %v856 = vand.u32 %v785, 2147483648
        %v857 = vor.u32 1.1754944e-38, %v856
        %v858 = vsel %vm855, %v857, %v853
        %v859 = vmul.f32 1.0, %v858
        %v860 = vrcp.pop %v786
        %v861 = vmul.f32 %v786, %v860
        %v862 = vsub.f32 1.0, %v861
        %v863 = vmul.f32 %v860, %v862
        %v864 = vadd.f32 %v860, %v863
        %vm865 = vweird.f32 %v786
        %vm866 = vweird.f32 %v860
        %vm867 = vmor %vm865, %vm866
        %v868 = vsel %vm867, %v860, %v864
        %v869 = vand.u32 2147483647, %v786
        %vm870 = vcmp.eq.f32.partialorder %v869, 8.507059e+37
        %v871 = vand.u32 %v786, 2147483648
        %v872 = vor.u32 1.1754944e-38, %v871
        %v873 = vsel %vm870, %v872, %v868
        %v874 = vmul.f32 1.0, %v873
        %v875 = vrcp.pop %v787
        %v876 = vmul.f32 %v787, %v875
        %v877 = vsub.f32 1.0, %v876
        %v878 = vmul.f32 %v875, %v877
        %v879 = vadd.f32 %v875, %v878
        %vm880 = vweird.f32 %v787
        %vm881 = vweird.f32 %v875
        %vm882 = vmor %vm880, %vm881
        %v883 = vsel %vm882, %v875, %v879
        %v884 = vand.u32 2147483647, %v787
        %vm885 = vcmp.eq.f32.partialorder %v884, 8.507059e+37
        %v886 = vand.u32 %v787, 2147483648
        %v887 = vor.u32 1.1754944e-38, %v886
        %v888 = vsel %vm885, %v887, %v883
        %v889 = vmul.f32 1.0, %v888
        %v890 = vrcp.pop %v788
        %v891 = vmul.f32 %v788, %v890
        %v892 = vsub.f32 1.0, %v891
        %v893 = vmul.f32 %v890, %v892
        %v894 = vadd.f32 %v890, %v893
        %vm895 = vweird.f32 %v788
        %vm896 = vweird.f32 %v890
        %vm897 = vmor %vm895, %vm896
        %v898 = vsel %vm897, %v890, %v894
        %v899 = vand.u32 2147483647, %v788
        %vm900 = vcmp.eq.f32.partialorder %v899, 8.507059e+37
        %v901 = vand.u32 %v788, 2147483648
        %v902 = vor.u32 1.1754944e-38, %v901
        %v903 = vsel %vm900, %v902, %v898
        %v904 = vmul.f32 1.0, %v903
        %v905 = vrcp.pop %v789
        %v906 = vmul.f32 %v789, %v905
        %v907 = vsub.f32 1.0, %v906
        %v908 = vmul.f32 %v905, %v907
        %v909 = vadd.f32 %v905, %v908
        %vm910 = vweird.f32 %v789
        %vm911 = vweird.f32 %v905
        %vm912 = vmor %vm910, %vm911
        %v913 = vsel %vm912, %v905, %v909
        %v914 = vand.u32 2147483647, %v789
        %vm915 = vcmp.eq.f32.partialorder %v914, 8.507059e+37
        %v916 = vand.u32 %v789, 2147483648
        %v917 = vor.u32 1.1754944e-38, %v916
        %v918 = vsel %vm915, %v917, %v913
        %v919 = vmul.f32 1.0, %v918
        %v920 = vrcp.pop %v790
        %v921 = vmul.f32 %v790, %v920
        %v922 = vsub.f32 1.0, %v921
        %v923 = vmul.f32 %v920, %v922
        %v924 = vadd.f32 %v920, %v923
        %vm925 = vweird.f32 %v790
        %vm926 = vweird.f32 %v920
        %vm927 = vmor %vm925, %vm926
        %v928 = vsel %vm927, %v920, %v924
        %v929 = vand.u32 2147483647, %v790
        %vm930 = vcmp.eq.f32.partialorder %v929, 8.507059e+37
        %v931 = vand.u32 %v790, 2147483648
        %v932 = vor.u32 1.1754944e-38, %v931
        %v933 = vsel %vm930, %v932, %v928
        %v934 = vmul.f32 1.0, %v933
        %v935 = vrcp.pop %v791
        %v936 = vmul.f32 %v791, %v935
        %v937 = vsub.f32 1.0, %v936
        %v938 = vmul.f32 %v935, %v937
        %v939 = vadd.f32 %v935, %v938
        %vm940 = vweird.f32 %v791
        %vm941 = vweird.f32 %v935
        %vm942 = vmor %vm940, %vm941
        %v943 = vsel %vm942, %v935, %v939
        %v944 = vand.u32 2147483647, %v791
        %vm945 = vcmp.eq.f32.partialorder %v944, 8.507059e+37
        %v946 = vand.u32 %v791, 2147483648
        %v947 = vor.u32 1.1754944e-38, %v946
        %v948 = vsel %vm945, %v947, %v943
        %v949 = vmul.f32 1.0, %v948
        %v950 = vrcp.pop %v792
        %v951 = vmul.f32 %v792, %v950
        %v952 = vsub.f32 1.0, %v951
        %v953 = vmul.f32 %v950, %v952
        %v954 = vadd.f32 %v950, %v953
        %vm955 = vweird.f32 %v792
        %vm956 = vweird.f32 %v950
        %vm957 = vmor %vm955, %vm956
        %v958 = vsel %vm957, %v950, %v954
        %v959 = vand.u32 2147483647, %v792
        %vm960 = vcmp.eq.f32.partialorder %v959, 8.507059e+37
        %v961 = vand.u32 %v792, 2147483648
        %v962 = vor.u32 1.1754944e-38, %v961
        %v963 = vsel %vm960, %v962, %v958
        %v964 = vmul.f32 1.0, %v963
        %v965 = vrcp.pop %v793
        %v966 = vmul.f32 %v793, %v965
        %v967 = vsub.f32 1.0, %v966
        %v968 = vmul.f32 %v965, %v967
        %v969 = vadd.f32 %v965, %v968
        %vm970 = vweird.f32 %v793
        %vm971 = vweird.f32 %v965
        %vm972 = vmor %vm970, %vm971
        %v973 = vsel %vm972, %v965, %v969
        %v974 = vand.u32 2147483647, %v793
        %vm975 = vcmp.eq.f32.partialorder %v974, 8.507059e+37
        %v976 = vand.u32 %v793, 2147483648
        %v977 = vor.u32 1.1754944e-38, %v976
        %v978 = vsel %vm975, %v977, %v973
        %v979 = vmul.f32 1.0, %v978
        %v980 = vrcp.pop %v794
        %v981 = vmul.f32 %v794, %v980
        %v982 = vsub.f32 1.0, %v981
        %v983 = vmul.f32 %v980, %v982
        %v984 = vadd.f32 %v980, %v983
        %vm985 = vweird.f32 %v794
        %vm986 = vweird.f32 %v980
        %vm987 = vmor %vm985, %vm986
        %v988 = vsel %vm987, %v980, %v984
        %v989 = vand.u32 2147483647, %v794
        %vm990 = vcmp.eq.f32.partialorder %v989, 8.507059e+37
        %v991 = vand.u32 %v794, 2147483648
        %v992 = vor.u32 1.1754944e-38, %v991
        %v993 = vsel %vm990, %v992, %v988
        %v994 = vmul.f32 1.0, %v993
        %v995 = vrcp.pop %v795
        %v996 = vmul.f32 %v795, %v995
        %v997 = vsub.f32 1.0, %v996
        %v998 = vmul.f32 %v995, %v997
        %v999 = vadd.f32 %v995, %v998
        %vm1000 = vweird.f32 %v795
        %vm1001 = vweird.f32 %v995
        %vm1002 = vmor %vm1000, %vm1001
        %v1003 = vsel %vm1002, %v995, %v999
        %v1004 = vand.u32 2147483647, %v795
        %vm1005 = vcmp.eq.f32.partialorder %v1004, 8.507059e+37
        %v1006 = vand.u32 %v795, 2147483648
        %v1007 = vor.u32 1.1754944e-38, %v1006
        %v1008 = vsel %vm1005, %v1007, %v1003
        %v1009 = vmul.f32 1.0, %v1008
        %v1010 = vrcp.pop %v796
        %v1011 = vmul.f32 %v796, %v1010
        %v1012 = vsub.f32 1.0, %v1011
        %v1013 = vmul.f32 %v1010, %v1012
        %v1014 = vadd.f32 %v1010, %v1013
        %vm1015 = vweird.f32 %v796
        %vm1016 = vweird.f32 %v1010
        %vm1017 = vmor %vm1015, %vm1016
        %v1018 = vsel %vm1017, %v1010, %v1014
        %v1019 = vand.u32 2147483647, %v796
        %vm1020 = vcmp.eq.f32.partialorder %v1019, 8.507059e+37
        %v1021 = vand.u32 %v796, 2147483648
        %v1022 = vor.u32 1.1754944e-38, %v1021
        %v1023 = vsel %vm1020, %v1022, %v1018
        %v1024 = vmul.f32 1.0, %v1023
        %v1025 = vrcp.pop %v797
        %v1026 = vmul.f32 %v797, %v1025
        %v1027 = vsub.f32 1.0, %v1026
        %v1028 = vmul.f32 %v1025, %v1027
        %v1029 = vadd.f32 %v1025, %v1028
        %vm1030 = vweird.f32 %v797
        %vm1031 = vweird.f32 %v1025
        %vm1032 = vmor %vm1030, %vm1031
        %v1033 = vsel %vm1032, %v1025, %v1029
        %v1034 = vand.u32 2147483647, %v797
        %vm1035 = vcmp.eq.f32.partialorder %v1034, 8.507059e+37
        %v1036 = vand.u32 %v797, 2147483648
        %v1037 = vor.u32 1.1754944e-38, %v1036
        %v1038 = vsel %vm1035, %v1037, %v1033
        %v1039 = vmul.f32 1.0, %v1038
        %v1040 = vrcp.pop %v798
        %v1041 = vmul.f32 %v798, %v1040
        %v1042 = vsub.f32 1.0, %v1041
        %v1043 = vmul.f32 %v1040, %v1042
        %v1044 = vadd.f32 %v1040, %v1043
        %vm1045 = vweird.f32 %v798
        %vm1046 = vweird.f32 %v1040
        %vm1047 = vmor %vm1045, %vm1046
        %v1048 = vsel %vm1047, %v1040, %v1044
        %v1049 = vand.u32 2147483647, %v798
        %vm1050 = vcmp.eq.f32.partialorder %v1049, 8.507059e+37
        %v1051 = vand.u32 %v798, 2147483648
        %v1052 = vor.u32 1.1754944e-38, %v1051
        %v1053 = vsel %vm1050, %v1052, %v1048
        %v1054 = vmul.f32 1.0, %v1053
        %v1055 = vrcp.pop %v799
        %v1056 = vmul.f32 %v799, %v1055
        %v1057 = vsub.f32 1.0, %v1056
        %v1058 = vmul.f32 %v1055, %v1057
        %v1059 = vadd.f32 %v1055, %v1058
        %vm1060 = vweird.f32 %v799
        %vm1061 = vweird.f32 %v1055
        %vm1062 = vmor %vm1060, %vm1061
        %v1063 = vsel %vm1062, %v1055, %v1059
        %v1064 = vand.u32 2147483647, %v799
        %vm1065 = vcmp.eq.f32.partialorder %v1064, 8.507059e+37
        %v1066 = vand.u32 %v799, 2147483648
        %v1067 = vor.u32 1.1754944e-38, %v1066
        %v1068 = vsel %vm1065, %v1067, %v1063
        %v1069 = vmul.f32 1.0, %v1068
        %v1070 = vrcp.pop %v800
        %v1071 = vmul.f32 %v800, %v1070
        %v1072 = vsub.f32 1.0, %v1071
        %v1073 = vmul.f32 %v1070, %v1072
        %v1074 = vadd.f32 %v1070, %v1073
        %vm1075 = vweird.f32 %v800
        %vm1076 = vweird.f32 %v1070
        %vm1077 = vmor %vm1075, %vm1076
        %v1078 = vsel %vm1077, %v1070, %v1074
        %v1079 = vand.u32 2147483647, %v800
        %vm1080 = vcmp.eq.f32.partialorder %v1079, 8.507059e+37
        %v1081 = vand.u32 %v800, 2147483648
        %v1082 = vor.u32 1.1754944e-38, %v1081
        %v1083 = vsel %vm1080, %v1082, %v1078
        %v1084 = vmul.f32 1.0, %v1083
        %v1085 = vrcp.pop %v801
        %v1086 = vmul.f32 %v801, %v1085
        %v1087 = vsub.f32 1.0, %v1086
        %v1088 = vmul.f32 %v1085, %v1087
        %v1089 = vadd.f32 %v1085, %v1088
        %vm1090 = vweird.f32 %v801
        %vm1091 = vweird.f32 %v1085
        %vm1092 = vmor %vm1090, %vm1091
        %v1093 = vsel %vm1092, %v1085, %v1089
        %v1094 = vand.u32 2147483647, %v801
        %vm1095 = vcmp.eq.f32.partialorder %v1094, 8.507059e+37
        %v1096 = vand.u32 %v801, 2147483648
        %v1097 = vor.u32 1.1754944e-38, %v1096
        %v1098 = vsel %vm1095, %v1097, %v1093
        %v1099 = vmul.f32 1.0, %v1098
        %v1100 = vrcp.pop %v802
        %v1101 = vmul.f32 %v802, %v1100
        %v1102 = vsub.f32 1.0, %v1101
        %v1103 = vmul.f32 %v1100, %v1102
        %v1104 = vadd.f32 %v1100, %v1103
        %vm1105 = vweird.f32 %v802
        %vm1106 = vweird.f32 %v1100
        %vm1107 = vmor %vm1105, %vm1106
        %v1108 = vsel %vm1107, %v1100, %v1104
        %v1109 = vand.u32 2147483647, %v802
        %vm1110 = vcmp.eq.f32.partialorder %v1109, 8.507059e+37
        %v1111 = vand.u32 %v802, 2147483648
        %v1112 = vor.u32 1.1754944e-38, %v1111
        %v1113 = vsel %vm1110, %v1112, %v1108
        %v1114 = vmul.f32 1.0, %v1113
        %v1115 = vrcp.pop %v803
        %v1116 = vmul.f32 %v803, %v1115
        %v1117 = vsub.f32 1.0, %v1116
        %v1118 = vmul.f32 %v1115, %v1117
        %v1119 = vadd.f32 %v1115, %v1118
        %vm1120 = vweird.f32 %v803
        %vm1121 = vweird.f32 %v1115
        %vm1122 = vmor %vm1120, %vm1121
        %v1123 = vsel %vm1122, %v1115, %v1119
        %v1124 = vand.u32 2147483647, %v803
        %vm1125 = vcmp.eq.f32.partialorder %v1124, 8.507059e+37
        %v1126 = vand.u32 %v803, 2147483648
        %v1127 = vor.u32 1.1754944e-38, %v1126
        %v1128 = vsel %vm1125, %v1127, %v1123
        %v1129 = vmul.f32 1.0, %v1128
        %v1130 = vrcp.pop %v804
        %v1131 = vmul.f32 %v804, %v1130
        %v1132 = vsub.f32 1.0, %v1131
        %v1133 = vmul.f32 %v1130, %v1132
        %v1134 = vadd.f32 %v1130, %v1133
        %vm1135 = vweird.f32 %v804
        %vm1136 = vweird.f32 %v1130
        %vm1137 = vmor %vm1135, %vm1136
        %v1138 = vsel %vm1137, %v1130, %v1134
        %v1139 = vand.u32 2147483647, %v804
        %vm1140 = vcmp.eq.f32.partialorder %v1139, 8.507059e+37
        %v1141 = vand.u32 %v804, 2147483648
        %v1142 = vor.u32 1.1754944e-38, %v1141
        %v1143 = vsel %vm1140, %v1142, %v1138
        %v1144 = vmul.f32 1.0, %v1143
        %v1145 = vrcp.pop %v805
        %v1146 = vmul.f32 %v805, %v1145
        %v1147 = vsub.f32 1.0, %v1146
        %v1148 = vmul.f32 %v1145, %v1147
        %v1149 = vadd.f32 %v1145, %v1148
        %vm1150 = vweird.f32 %v805
        %vm1151 = vweird.f32 %v1145
        %vm1152 = vmor %vm1150, %vm1151
        %v1153 = vsel %vm1152, %v1145, %v1149
        %v1154 = vand.u32 2147483647, %v805
        %vm1155 = vcmp.eq.f32.partialorder %v1154, 8.507059e+37
        %v1156 = vand.u32 %v805, 2147483648
        %v1157 = vor.u32 1.1754944e-38, %v1156
        %v1158 = vsel %vm1155, %v1157, %v1153
        %v1159 = vmul.f32 1.0, %v1158
        %v1160 = vrcp.pop %v806
        %v1161 = vmul.f32 %v806, %v1160
        %v1162 = vsub.f32 1.0, %v1161
        %v1163 = vmul.f32 %v1160, %v1162
        %v1164 = vadd.f32 %v1160, %v1163
        %vm1165 = vweird.f32 %v806
        %vm1166 = vweird.f32 %v1160
        %vm1167 = vmor %vm1165, %vm1166
        %v1168 = vsel %vm1167, %v1160, %v1164
        %v1169 = vand.u32 2147483647, %v806
        %vm1170 = vcmp.eq.f32.partialorder %v1169, 8.507059e+37
        %v1171 = vand.u32 %v806, 2147483648
        %v1172 = vor.u32 1.1754944e-38, %v1171
        %v1173 = vsel %vm1170, %v1172, %v1168
        %v1174 = vmul.f32 1.0, %v1173
        %v1175 = vrcp.pop %v807
        %v1176 = vmul.f32 %v807, %v1175
        %v1177 = vsub.f32 1.0, %v1176
        %v1178 = vmul.f32 %v1175, %v1177
        %v1179 = vadd.f32 %v1175, %v1178
        %vm1180 = vweird.f32 %v807
        %vm1181 = vweird.f32 %v1175
        %vm1182 = vmor %vm1180, %vm1181
        %v1183 = vsel %vm1182, %v1175, %v1179
        %v1184 = vand.u32 2147483647, %v807
        %vm1185 = vcmp.eq.f32.partialorder %v1184, 8.507059e+37
        %v1186 = vand.u32 %v807, 2147483648
        %v1187 = vor.u32 1.1754944e-38, %v1186
        %v1188 = vsel %vm1185, %v1187, %v1183
        %v1189 = vmul.f32 1.0, %v1188
        %v1190 = vrcp.pop %v808
        %v1191 = vmul.f32 %v808, %v1190
        %v1192 = vsub.f32 1.0, %v1191
        %v1193 = vmul.f32 %v1190, %v1192
        %v1194 = vadd.f32 %v1190, %v1193
        %vm1195 = vweird.f32 %v808
        %vm1196 = vweird.f32 %v1190
        %vm1197 = vmor %vm1195, %vm1196
        %v1198 = vsel %vm1197, %v1190, %v1194
        %v1199 = vand.u32 2147483647, %v808
        %vm1200 = vcmp.eq.f32.partialorder %v1199, 8.507059e+37
        %v1201 = vand.u32 %v808, 2147483648
        %v1202 = vor.u32 1.1754944e-38, %v1201
        %v1203 = vsel %vm1200, %v1202, %v1198
        %v1204 = vmul.f32 1.0, %v1203
        %v1205 = vrcp.pop %v809
        %v1206 = vmul.f32 %v809, %v1205
        %v1207 = vsub.f32 1.0, %v1206
        %v1208 = vmul.f32 %v1205, %v1207
        %v1209 = vadd.f32 %v1205, %v1208
        %vm1210 = vweird.f32 %v809
        %vm1211 = vweird.f32 %v1205
        %vm1212 = vmor %vm1210, %vm1211
        %v1213 = vsel %vm1212, %v1205, %v1209
        %v1214 = vand.u32 2147483647, %v809
        %vm1215 = vcmp.eq.f32.partialorder %v1214, 8.507059e+37
        %v1216 = vand.u32 %v809, 2147483648
        %v1217 = vor.u32 1.1754944e-38, %v1216
        %v1218 = vsel %vm1215, %v1217, %v1213
        %v1219 = vmul.f32 1.0, %v1218
        %v1220 = vrcp.pop %v810
        %v1221 = vmul.f32 %v810, %v1220
        %v1222 = vsub.f32 1.0, %v1221
        %v1223 = vmul.f32 %v1220, %v1222
        %v1224 = vadd.f32 %v1220, %v1223
        %vm1225 = vweird.f32 %v810
        %vm1226 = vweird.f32 %v1220
        %vm1227 = vmor %vm1225, %vm1226
        %v1228 = vsel %vm1227, %v1220, %v1224
        %v1229 = vand.u32 2147483647, %v810
        %vm1230 = vcmp.eq.f32.partialorder %v1229, 8.507059e+37
        %v1231 = vand.u32 %v810, 2147483648
        %v1232 = vor.u32 1.1754944e-38, %v1231
        %v1233 = vsel %vm1230, %v1232, %v1228
        %v1234 = vmul.f32 1.0, %v1233
        %v1235 = vrcp.pop %v811
        %v1236 = vmul.f32 %v811, %v1235
        %v1237 = vsub.f32 1.0, %v1236
        %v1238 = vmul.f32 %v1235, %v1237
        %v1239 = vadd.f32 %v1235, %v1238
        %vm1240 = vweird.f32 %v811
        %vm1241 = vweird.f32 %v1235
        %vm1242 = vmor %vm1240, %vm1241
        %v1243 = vsel %vm1242, %v1235, %v1239
        %v1244 = vand.u32 2147483647, %v811
        %vm1245 = vcmp.eq.f32.partialorder %v1244, 8.507059e+37
        %v1246 = vand.u32 %v811, 2147483648
        %v1247 = vor.u32 1.1754944e-38, %v1246
        %v1248 = vsel %vm1245, %v1247, %v1243
        %v1249 = vmul.f32 1.0, %v1248
        %v1250 = vrcp.pop %v812
        %v1251 = vmul.f32 %v812, %v1250
        %v1252 = vsub.f32 1.0, %v1251
        %v1253 = vmul.f32 %v1250, %v1252
        %v1254 = vadd.f32 %v1250, %v1253
        %vm1255 = vweird.f32 %v812
        %vm1256 = vweird.f32 %v1250
        %vm1257 = vmor %vm1255, %vm1256
        %v1258 = vsel %vm1257, %v1250, %v1254
        %v1259 = vand.u32 2147483647, %v812
        %vm1260 = vcmp.eq.f32.partialorder %v1259, 8.507059e+37
        %v1261 = vand.u32 %v812, 2147483648
        %v1262 = vor.u32 1.1754944e-38, %v1261
        %v1263 = vsel %vm1260, %v1262, %v1258
        %v1264 = vmul.f32 1.0, %v1263
        %v1265 = vrcp.pop %v813
        %v1266 = vmul.f32 %v813, %v1265
        %v1267 = vsub.f32 1.0, %v1266
        %v1268 = vmul.f32 %v1265, %v1267
        %v1269 = vadd.f32 %v1265, %v1268
        %vm1270 = vweird.f32 %v813
        %vm1271 = vweird.f32 %v1265
        %vm1272 = vmor %vm1270, %vm1271
        %v1273 = vsel %vm1272, %v1265, %v1269
        %v1274 = vand.u32 2147483647, %v813
        %vm1275 = vcmp.eq.f32.partialorder %v1274, 8.507059e+37
        %v1276 = vand.u32 %v813, 2147483648
        %v1277 = vor.u32 1.1754944e-38, %v1276
        %v1278 = vsel %vm1275, %v1277, %v1273
        %v1279 = vmul.f32 1.0, %v1278
        %v1280 = vrcp.pop %v814
        %v1281 = vmul.f32 %v814, %v1280
        %v1282 = vsub.f32 1.0, %v1281
        %v1283 = vmul.f32 %v1280, %v1282
        %v1284 = vadd.f32 %v1280, %v1283
        %vm1285 = vweird.f32 %v814
        %vm1286 = vweird.f32 %v1280
        %vm1287 = vmor %vm1285, %vm1286
        %v1288 = vsel %vm1287, %v1280, %v1284
        %v1289 = vand.u32 2147483647, %v814
        %vm1290 = vcmp.eq.f32.partialorder %v1289, 8.507059e+37
        %v1291 = vand.u32 %v814, 2147483648
        %v1292 = vor.u32 1.1754944e-38, %v1291
        %v1293 = vsel %vm1290, %v1292, %v1288
        %v1294 = vmul.f32 1.0, %v1293
        %v1295 = vpack.c.bf16 %v844, %v829
        %v1296 = vpack.c.bf16 %v874, %v859
        %v1297 = vpack.c.bf16 %v904, %v889
        %v1298 = vpack.c.bf16 %v934, %v919
        %v1299 = vpack.c.bf16 %v964, %v949
        %v1300 = vpack.c.bf16 %v994, %v979
        %v1301 = vpack.c.bf16 %v1024, %v1009
        %v1302 = vpack.c.bf16 %v1054, %v1039
        %v1303 = vpack.c.bf16 %v1084, %v1069
        %v1304 = vpack.c.bf16 %v1114, %v1099
        %v1305 = vpack.c.bf16 %v1144, %v1129
        %v1306 = vpack.c.bf16 %v1174, %v1159
        %v1307 = vpack.c.bf16 %v1204, %v1189
        %v1308 = vpack.c.bf16 %v1234, %v1219
        %v1309 = vpack.c.bf16 %v1264, %v1249
        %v1310 = vpack.c.bf16 %v1294, %v1279
        %v1311 = vld [vmem:[#allocation7] sm:$0xff]
        %v1312 = vld [vmem:[#allocation7 + $0x8] sm:$0xff]
        %v1313 = vld [vmem:[#allocation7 + $0x10] sm:$0xff]
        %v1314 = vld [vmem:[#allocation7 + $0x18] sm:$0xff]
        %v1315 = vld [vmem:[#allocation7 + $0x20] sm:$0xff]
        %v1316 = vld [vmem:[#allocation7 + $0x28] sm:$0xff]
        %v1317 = vld [vmem:[#allocation7 + $0x30] sm:$0xff]
        %v1318 = vld [vmem:[#allocation7 + $0x38] sm:$0xff]
        %v1319 = vld [vmem:[#allocation7 + $0x40] sm:$0xff]
        %v1320 = vld [vmem:[#allocation7 + $0x48] sm:$0xff]
        %v1321 = vld [vmem:[#allocation7 + $0x50] sm:$0xff]
        %v1322 = vld [vmem:[#allocation7 + $0x58] sm:$0xff]
        %v1323 = vld [vmem:[#allocation7 + $0x60] sm:$0xff]
        %v1324 = vld [vmem:[#allocation7 + $0x68] sm:$0xff]
        %v1325 = vld [vmem:[#allocation7 + $0x70] sm:$0xff]
        %v1326 = vld [vmem:[#allocation7 + $0x78] sm:$0xff]
        %v1327 = vld [vmem:[%s4] sm:$0x3]
        %v1329 = vperm.slane %v1327, 0
        %v1330 = vperm.slane %v1327, 1
        %v1349 = vunpack.c.l.b16 %v1311
        %v1350 = vunpack.c.h.b16 %v1311
        %v1351 = vunpack.c.l.b16 %v1312
        %v1352 = vunpack.c.h.b16 %v1312
        %v1353 = vunpack.c.l.b16 %v1313
        %v1354 = vunpack.c.h.b16 %v1313
        %v1355 = vunpack.c.l.b16 %v1314
        %v1356 = vunpack.c.h.b16 %v1314
        %v1357 = vunpack.c.l.b16 %v1315
        %v1358 = vunpack.c.h.b16 %v1315
        %v1359 = vunpack.c.l.b16 %v1316
        %v1360 = vunpack.c.h.b16 %v1316
        %v1361 = vunpack.c.l.b16 %v1317
        %v1362 = vunpack.c.h.b16 %v1317
        %v1363 = vunpack.c.l.b16 %v1318
        %v1364 = vunpack.c.h.b16 %v1318
        %v1365 = vunpack.c.l.b16 %v1319
        %v1366 = vunpack.c.h.b16 %v1319
        %v1367 = vunpack.c.l.b16 %v1320
        %v1368 = vunpack.c.h.b16 %v1320
        %v1369 = vunpack.c.l.b16 %v1321
        %v1370 = vunpack.c.h.b16 %v1321
        %v1371 = vunpack.c.l.b16 %v1322
        %v1372 = vunpack.c.h.b16 %v1322
        %v1373 = vunpack.c.l.b16 %v1323
        %v1374 = vunpack.c.h.b16 %v1323
        %v1375 = vunpack.c.l.b16 %v1324
        %v1376 = vunpack.c.h.b16 %v1324
        %v1377 = vunpack.c.l.b16 %v1325
        %v1378 = vunpack.c.h.b16 %v1325
        %v1379 = vunpack.c.l.b16 %v1326
        %v1380 = vunpack.c.h.b16 %v1326
        %v1381 = vpack.c.b16 %v1351, %v1349
        %v1382 = vpack.c.b16 %v1352, %v1350
        %v1383 = vpack.c.b16 %v1355, %v1353
        %v1384 = vpack.c.b16 %v1356, %v1354
        %v1385 = vpack.c.b16 %v1359, %v1357
        %v1386 = vpack.c.b16 %v1360, %v1358
        %v1387 = vpack.c.b16 %v1363, %v1361
        %v1388 = vpack.c.b16 %v1364, %v1362
        %v1389 = vpack.c.b16 %v1367, %v1365
        %v1390 = vpack.c.b16 %v1368, %v1366
        %v1391 = vpack.c.b16 %v1371, %v1369
        %v1392 = vpack.c.b16 %v1372, %v1370
        %v1393 = vpack.c.b16 %v1375, %v1373
        %v1394 = vpack.c.b16 %v1376, %v1374
        %v1395 = vpack.c.b16 %v1379, %v1377
        %v1396 = vpack.c.b16 %v1380, %v1378
        %1413 = vmatpush.bf16.msra.mxu0 %v1395
        %1414 = vmatpush.bf16.msra.mxu0 %v1393
        %1415 = vmatpush.bf16.msra.mxu0 %v1391
        %1416 = vmatpush.bf16.msra.mxu0 %v1389
        %1417 = vmatpush.bf16.msra.mxu0 %v1387
        %1418 = vmatpush.bf16.msra.mxu0 %v1385
        %1419 = vmatpush.bf16.msra.mxu0 %v1383
        %1420 = vmatpush.bf16.msra.mxu0 %v1381
        %1421 = vmatmul.bf16.gmra.mxu0 %v1295
        %v1422 = vpop.f32.mrf.mxu0
        %v1423 = vadd.f32 %v1329, %v1422
        %v1424 = vpop.f32.mrf.mxu0
        %v1425 = vadd.f32 %v1329, %v1424
        %1426 = vmatmul.bf16.gmra.mxu0 %v1296
        %v1427 = vpop.f32.mrf.mxu0
        %v1428 = vadd.f32 %v1329, %v1427
        %v1429 = vpop.f32.mrf.mxu0
        %v1430 = vadd.f32 %v1329, %v1429
        %1431 = vmatmul.bf16.gmra.mxu0 %v1297
        %v1432 = vpop.f32.mrf.mxu0
        %v1433 = vadd.f32 %v1329, %v1432
        %v1434 = vpop.f32.mrf.mxu0
        %v1435 = vadd.f32 %v1329, %v1434
        %1436 = vmatmul.bf16.gmra.mxu0 %v1298
        %v1437 = vpop.f32.mrf.mxu0
        %v1438 = vadd.f32 %v1329, %v1437
        %v1439 = vpop.f32.mrf.mxu0
        %v1440 = vadd.f32 %v1329, %v1439
        %1441 = vmatmul.bf16.gmra.mxu0 %v1299
        %v1442 = vpop.f32.mrf.mxu0
        %v1443 = vadd.f32 %v1329, %v1442
        %v1444 = vpop.f32.mrf.mxu0
        %v1445 = vadd.f32 %v1329, %v1444
        %1446 = vmatmul.bf16.gmra.mxu0 %v1300
        %v1447 = vpop.f32.mrf.mxu0
        %v1448 = vadd.f32 %v1329, %v1447
        %v1449 = vpop.f32.mrf.mxu0
        %v1450 = vadd.f32 %v1329, %v1449
        %1451 = vmatmul.bf16.gmra.mxu0 %v1301
        %v1452 = vpop.f32.mrf.mxu0
        %v1453 = vadd.f32 %v1329, %v1452
        %v1454 = vpop.f32.mrf.mxu0
        %v1455 = vadd.f32 %v1329, %v1454
        %1456 = vmatmul.bf16.gmra.mxu0 %v1302
        %v1457 = vpop.f32.mrf.mxu0
        %v1458 = vadd.f32 %v1329, %v1457
        %v1459 = vpop.f32.mrf.mxu0
        %v1460 = vadd.f32 %v1329, %v1459
        %1461 = vmatmul.bf16.gmra.mxu0 %v1303
        %v1462 = vpop.f32.mrf.mxu0
        %v1463 = vadd.f32 %v1329, %v1462
        %v1464 = vpop.f32.mrf.mxu0
        %v1465 = vadd.f32 %v1329, %v1464
        %1466 = vmatmul.bf16.gmra.mxu0 %v1304
        %v1467 = vpop.f32.mrf.mxu0
        %v1468 = vadd.f32 %v1329, %v1467
        %v1469 = vpop.f32.mrf.mxu0
        %v1470 = vadd.f32 %v1329, %v1469
        %1471 = vmatmul.bf16.gmra.mxu0 %v1305
        %v1472 = vpop.f32.mrf.mxu0
        %v1473 = vadd.f32 %v1329, %v1472
        %v1474 = vpop.f32.mrf.mxu0
        %v1475 = vadd.f32 %v1329, %v1474
        %1476 = vmatmul.bf16.gmra.mxu0 %v1306
        %v1477 = vpop.f32.mrf.mxu0
        %v1478 = vadd.f32 %v1329, %v1477
        %v1479 = vpop.f32.mrf.mxu0
        %v1480 = vadd.f32 %v1329, %v1479
        %1481 = vmatmul.bf16.gmra.mxu0 %v1307
        %v1482 = vpop.f32.mrf.mxu0
        %v1483 = vadd.f32 %v1329, %v1482
        %v1484 = vpop.f32.mrf.mxu0
        %v1485 = vadd.f32 %v1329, %v1484
        %1486 = vmatmul.bf16.gmra.mxu0 %v1308
        %v1487 = vpop.f32.mrf.mxu0
        %v1488 = vadd.f32 %v1329, %v1487
        %v1489 = vpop.f32.mrf.mxu0
        %v1490 = vadd.f32 %v1329, %v1489
        %1491 = vmatmul.bf16.gmra.mxu0 %v1309
        %v1492 = vpop.f32.mrf.mxu0
        %v1493 = vadd.f32 %v1329, %v1492
        %v1494 = vpop.f32.mrf.mxu0
        %v1495 = vadd.f32 %v1329, %v1494
        %1496 = vmatmul.bf16.gmra.mxu0 %v1310
        %v1497 = vpop.f32.mrf.mxu0
        %v1498 = vadd.f32 %v1329, %v1497
        %v1499 = vpop.f32.mrf.mxu0
        %v1500 = vadd.f32 %v1329, %v1499
        %1501 = vdwg.mxu0
        %1502 = vmatpush.bf16.msra.mxu0 %v1396
        %1503 = vmatpush.bf16.msra.mxu0 %v1394
        %1504 = vmatpush.bf16.msra.mxu0 %v1392
        %1505 = vmatpush.bf16.msra.mxu0 %v1390
        %1506 = vmatpush.bf16.msra.mxu0 %v1388
        %1507 = vmatpush.bf16.msra.mxu0 %v1386
        %1508 = vmatpush.bf16.msra.mxu0 %v1384
        %1509 = vmatpush.bf16.msra.mxu0 %v1382
        %1510 = vmatmul.bf16.gmra.mxu0 %v1295
        %v1511 = vpop.f32.mrf.mxu0
        %v1512 = vadd.f32 %v1330, %v1511
        %v1513 = vpop.f32.mrf.mxu0
        %v1514 = vadd.f32 %v1330, %v1513
        %1515 = vmatmul.bf16.gmra.mxu0 %v1296
        %v1516 = vpop.f32.mrf.mxu0
        %v1517 = vadd.f32 %v1330, %v1516
        %v1518 = vpop.f32.mrf.mxu0
        %v1519 = vadd.f32 %v1330, %v1518
        %1520 = vmatmul.bf16.gmra.mxu0 %v1297
        %v1521 = vpop.f32.mrf.mxu0
        %v1522 = vadd.f32 %v1330, %v1521
        %v1523 = vpop.f32.mrf.mxu0
        %v1524 = vadd.f32 %v1330, %v1523
        %1525 = vmatmul.bf16.gmra.mxu0 %v1298
        %v1526 = vpop.f32.mrf.mxu0
        %v1527 = vadd.f32 %v1330, %v1526
        %v1528 = vpop.f32.mrf.mxu0
        %v1529 = vadd.f32 %v1330, %v1528
        %1530 = vmatmul.bf16.gmra.mxu0 %v1299
        %v1531 = vpop.f32.mrf.mxu0
        %v1532 = vadd.f32 %v1330, %v1531
        %v1533 = vpop.f32.mrf.mxu0
        %v1534 = vadd.f32 %v1330, %v1533
        %1535 = vmatmul.bf16.gmra.mxu0 %v1300
        %v1536 = vpop.f32.mrf.mxu0
        %v1537 = vadd.f32 %v1330, %v1536
        %v1538 = vpop.f32.mrf.mxu0
        %v1539 = vadd.f32 %v1330, %v1538
        %1540 = vmatmul.bf16.gmra.mxu0 %v1301
        %v1541 = vpop.f32.mrf.mxu0
        %v1542 = vadd.f32 %v1330, %v1541
        %v1543 = vpop.f32.mrf.mxu0
        %v1544 = vadd.f32 %v1330, %v1543
        %1545 = vmatmul.bf16.gmra.mxu0 %v1302
        %v1546 = vpop.f32.mrf.mxu0
        %v1547 = vadd.f32 %v1330, %v1546
        %v1548 = vpop.f32.mrf.mxu0
        %v1549 = vadd.f32 %v1330, %v1548
        %1550 = vmatmul.bf16.gmra.mxu0 %v1303
        %v1551 = vpop.f32.mrf.mxu0
        %v1552 = vadd.f32 %v1330, %v1551
        %v1553 = vpop.f32.mrf.mxu0
        %v1554 = vadd.f32 %v1330, %v1553
        %1555 = vmatmul.bf16.gmra.mxu0 %v1304
        %v1556 = vpop.f32.mrf.mxu0
        %v1557 = vadd.f32 %v1330, %v1556
        %v1558 = vpop.f32.mrf.mxu0
        %v1559 = vadd.f32 %v1330, %v1558
        %1560 = vmatmul.bf16.gmra.mxu0 %v1305
        %v1561 = vpop.f32.mrf.mxu0
        %v1562 = vadd.f32 %v1330, %v1561
        %v1563 = vpop.f32.mrf.mxu0
        %v1564 = vadd.f32 %v1330, %v1563
        %1565 = vmatmul.bf16.gmra.mxu0 %v1306
        %v1566 = vpop.f32.mrf.mxu0
        %v1567 = vadd.f32 %v1330, %v1566
        %v1568 = vpop.f32.mrf.mxu0
        %v1569 = vadd.f32 %v1330, %v1568
        %1570 = vmatmul.bf16.gmra.mxu0 %v1307
        %v1571 = vpop.f32.mrf.mxu0
        %v1572 = vadd.f32 %v1330, %v1571
        %v1573 = vpop.f32.mrf.mxu0
        %v1574 = vadd.f32 %v1330, %v1573
        %1575 = vmatmul.bf16.gmra.mxu0 %v1308
        %v1576 = vpop.f32.mrf.mxu0
        %v1577 = vadd.f32 %v1330, %v1576
        %v1578 = vpop.f32.mrf.mxu0
        %v1579 = vadd.f32 %v1330, %v1578
        %1580 = vmatmul.bf16.gmra.mxu0 %v1309
        %v1581 = vpop.f32.mrf.mxu0
        %v1582 = vadd.f32 %v1330, %v1581
        %v1583 = vpop.f32.mrf.mxu0
        %v1584 = vadd.f32 %v1330, %v1583
        %1585 = vmatmul.bf16.gmra.mxu0 %v1310
        %v1586 = vpop.f32.mrf.mxu0
        %v1587 = vadd.f32 %v1330, %v1586
        %v1588 = vpop.f32.mrf.mxu0
        %v1589 = vadd.f32 %v1330, %v1588
        %1590 = vdwg.mxu0
        %v1591 = vxor.u32 %v1423, 2147483648
        %v1592 = vxor.u32 %v1512, 2147483648
        %v1593 = vxor.u32 %v1425, 2147483648
        %v1594 = vxor.u32 %v1514, 2147483648
        %v1595 = vxor.u32 %v1428, 2147483648
        %v1596 = vxor.u32 %v1517, 2147483648
        %v1597 = vxor.u32 %v1430, 2147483648
        %v1598 = vxor.u32 %v1519, 2147483648
        %v1599 = vxor.u32 %v1433, 2147483648
        %v1600 = vxor.u32 %v1522, 2147483648
        %v1601 = vxor.u32 %v1435, 2147483648
        %v1602 = vxor.u32 %v1524, 2147483648
        %v1603 = vxor.u32 %v1438, 2147483648
        %v1604 = vxor.u32 %v1527, 2147483648
        %v1605 = vxor.u32 %v1440, 2147483648
        %v1606 = vxor.u32 %v1529, 2147483648
        %v1607 = vxor.u32 %v1443, 2147483648
        %v1608 = vxor.u32 %v1532, 2147483648
        %v1609 = vxor.u32 %v1445, 2147483648
        %v1610 = vxor.u32 %v1534, 2147483648
        %v1611 = vxor.u32 %v1448, 2147483648
        %v1612 = vxor.u32 %v1537, 2147483648
        %v1613 = vxor.u32 %v1450, 2147483648
        %v1614 = vxor.u32 %v1539, 2147483648
        %v1615 = vxor.u32 %v1453, 2147483648
        %v1616 = vxor.u32 %v1542, 2147483648
        %v1617 = vxor.u32 %v1455, 2147483648
        %v1618 = vxor.u32 %v1544, 2147483648
        %v1619 = vxor.u32 %v1458, 2147483648
        %v1620 = vxor.u32 %v1547, 2147483648
        %v1621 = vxor.u32 %v1460, 2147483648
        %v1622 = vxor.u32 %v1549, 2147483648
        %v1623 = vxor.u32 %v1463, 2147483648
        %v1624 = vxor.u32 %v1552, 2147483648
        %v1625 = vxor.u32 %v1465, 2147483648
        %v1626 = vxor.u32 %v1554, 2147483648
        %v1627 = vxor.u32 %v1468, 2147483648
        %v1628 = vxor.u32 %v1557, 2147483648
        %v1629 = vxor.u32 %v1470, 2147483648
        %v1630 = vxor.u32 %v1559, 2147483648
        %v1631 = vxor.u32 %v1473, 2147483648
        %v1632 = vxor.u32 %v1562, 2147483648
        %v1633 = vxor.u32 %v1475, 2147483648
        %v1634 = vxor.u32 %v1564, 2147483648
        %v1635 = vxor.u32 %v1478, 2147483648
        %v1636 = vxor.u32 %v1567, 2147483648
        %v1637 = vxor.u32 %v1480, 2147483648
        %v1638 = vxor.u32 %v1569, 2147483648
        %v1639 = vxor.u32 %v1483, 2147483648
        %v1640 = vxor.u32 %v1572, 2147483648
        %v1641 = vxor.u32 %v1485, 2147483648
        %v1642 = vxor.u32 %v1574, 2147483648
        %v1643 = vxor.u32 %v1488, 2147483648
        %v1644 = vxor.u32 %v1577, 2147483648
        %v1645 = vxor.u32 %v1490, 2147483648
        %v1646 = vxor.u32 %v1579, 2147483648
        %v1647 = vxor.u32 %v1493, 2147483648
        %v1648 = vxor.u32 %v1582, 2147483648
        %v1649 = vxor.u32 %v1495, 2147483648
        %v1650 = vxor.u32 %v1584, 2147483648
        %v1651 = vxor.u32 %v1498, 2147483648
        %v1652 = vxor.u32 %v1587, 2147483648
        %v1653 = vxor.u32 %v1500, 2147483648
        %v1654 = vxor.u32 %v1589, 2147483648
        %v1655 = vmul.f32 %v1591, 1.442695
        %v1656 = vpow.pop %v1655
        %v1657 = vmul.f32 %v1592, 1.442695
        %v1658 = vpow.pop %v1657
        %v1659 = vmul.f32 %v1593, 1.442695
        %v1660 = vpow.pop %v1659
        %v1661 = vmul.f32 %v1594, 1.442695
        %v1662 = vpow.pop %v1661
        %v1663 = vmul.f32 %v1595, 1.442695
        %v1664 = vpow.pop %v1663
        %v1665 = vmul.f32 %v1596, 1.442695
        %v1666 = vpow.pop %v1665
        %v1667 = vmul.f32 %v1597, 1.442695
        %v1668 = vpow.pop %v1667
        %v1669 = vmul.f32 %v1598, 1.442695
        %v1670 = vpow.pop %v1669
        %v1671 = vmul.f32 %v1599, 1.442695
        %v1672 = vpow.pop %v1671
        %v1673 = vmul.f32 %v1600, 1.442695
        %v1674 = vpow.pop %v1673
        %v1675 = vmul.f32 %v1601, 1.442695
        %v1676 = vpow.pop %v1675
        %v1677 = vmul.f32 %v1602, 1.442695
        %v1678 = vpow.pop %v1677
        %v1679 = vmul.f32 %v1603, 1.442695
        %v1680 = vpow.pop %v1679
        %v1681 = vmul.f32 %v1604, 1.442695
        %v1682 = vpow.pop %v1681
        %v1683 = vmul.f32 %v1605, 1.442695
        %v1684 = vpow.pop %v1683
        %v1685 = vmul.f32 %v1606, 1.442695
        %v1686 = vpow.pop %v1685
        %v1687 = vmul.f32 %v1607, 1.442695
        %v1688 = vpow.pop %v1687
        %v1689 = vmul.f32 %v1608, 1.442695
        %v1690 = vpow.pop %v1689
        %v1691 = vmul.f32 %v1609, 1.442695
        %v1692 = vpow.pop %v1691
        %v1693 = vmul.f32 %v1610, 1.442695
        %v1694 = vpow.pop %v1693
        %v1695 = vmul.f32 %v1611, 1.442695
        %v1696 = vpow.pop %v1695
        %v1697 = vmul.f32 %v1612, 1.442695
        %v1698 = vpow.pop %v1697
        %v1699 = vmul.f32 %v1613, 1.442695
        %v1700 = vpow.pop %v1699
        %v1701 = vmul.f32 %v1614, 1.442695
        %v1702 = vpow.pop %v1701
        %v1703 = vmul.f32 %v1615, 1.442695
        %v1704 = vpow.pop %v1703
        %v1705 = vmul.f32 %v1616, 1.442695
        %v1706 = vpow.pop %v1705
        %v1707 = vmul.f32 %v1617, 1.442695
        %v1708 = vpow.pop %v1707
        %v1709 = vmul.f32 %v1618, 1.442695
        %v1710 = vpow.pop %v1709
        %v1711 = vmul.f32 %v1619, 1.442695
        %v1712 = vpow.pop %v1711
        %v1713 = vmul.f32 %v1620, 1.442695
        %v1714 = vpow.pop %v1713
        %v1715 = vmul.f32 %v1621, 1.442695
        %v1716 = vpow.pop %v1715
        %v1717 = vmul.f32 %v1622, 1.442695
        %v1718 = vpow.pop %v1717
        %v1719 = vmul.f32 %v1623, 1.442695
        %v1720 = vpow.pop %v1719
        %v1721 = vmul.f32 %v1624, 1.442695
        %v1722 = vpow.pop %v1721
        %v1723 = vmul.f32 %v1625, 1.442695
        %v1724 = vpow.pop %v1723
        %v1725 = vmul.f32 %v1626, 1.442695
        %v1726 = vpow.pop %v1725
        %v1727 = vmul.f32 %v1627, 1.442695
        %v1728 = vpow.pop %v1727
        %v1729 = vmul.f32 %v1628, 1.442695
        %v1730 = vpow.pop %v1729
        %v1731 = vmul.f32 %v1629, 1.442695
        %v1732 = vpow.pop %v1731
        %v1733 = vmul.f32 %v1630, 1.442695
        %v1734 = vpow.pop %v1733
        %v1735 = vmul.f32 %v1631, 1.442695
        %v1736 = vpow.pop %v1735
        %v1737 = vmul.f32 %v1632, 1.442695
        %v1738 = vpow.pop %v1737
        %v1739 = vmul.f32 %v1633, 1.442695
        %v1740 = vpow.pop %v1739
        %v1741 = vmul.f32 %v1634, 1.442695
        %v1742 = vpow.pop %v1741
        %v1743 = vmul.f32 %v1635, 1.442695
        %v1744 = vpow.pop %v1743
        %v1745 = vmul.f32 %v1636, 1.442695
        %v1746 = vpow.pop %v1745
        %v1747 = vmul.f32 %v1637, 1.442695
        %v1748 = vpow.pop %v1747
        %v1749 = vmul.f32 %v1638, 1.442695
        %v1750 = vpow.pop %v1749
        %v1751 = vmul.f32 %v1639, 1.442695
        %v1752 = vpow.pop %v1751
        %v1753 = vmul.f32 %v1640, 1.442695
        %v1754 = vpow.pop %v1753
        %v1755 = vmul.f32 %v1641, 1.442695
        %v1756 = vpow.pop %v1755
        %v1757 = vmul.f32 %v1642, 1.442695
        %v1758 = vpow.pop %v1757
        %v1759 = vmul.f32 %v1643, 1.442695
        %v1760 = vpow.pop %v1759
        %v1761 = vmul.f32 %v1644, 1.442695
        %v1762 = vpow.pop %v1761
        %v1763 = vmul.f32 %v1645, 1.442695
        %v1764 = vpow.pop %v1763
        %v1765 = vmul.f32 %v1646, 1.442695
        %v1766 = vpow.pop %v1765
        %v1767 = vmul.f32 %v1647, 1.442695
        %v1768 = vpow.pop %v1767
        %v1769 = vmul.f32 %v1648, 1.442695
        %v1770 = vpow.pop %v1769
        %v1771 = vmul.f32 %v1649, 1.442695
        %v1772 = vpow.pop %v1771
        %v1773 = vmul.f32 %v1650, 1.442695
        %v1774 = vpow.pop %v1773
        %v1775 = vmul.f32 %v1651, 1.442695
        %v1776 = vpow.pop %v1775
        %v1777 = vmul.f32 %v1652, 1.442695
        %v1778 = vpow.pop %v1777
        %v1779 = vmul.f32 %v1653, 1.442695
        %v1780 = vpow.pop %v1779
        %v1781 = vmul.f32 %v1654, 1.442695
        %v1782 = vpow.pop %v1781
        %v1783 = vadd.f32 %v1656, 1.0
        %v1784 = vadd.f32 %v1658, 1.0
        %v1785 = vadd.f32 %v1660, 1.0
        %v1786 = vadd.f32 %v1662, 1.0
        %v1787 = vadd.f32 %v1664, 1.0
        %v1788 = vadd.f32 %v1666, 1.0
        %v1789 = vadd.f32 %v1668, 1.0
        %v1790 = vadd.f32 %v1670, 1.0
        %v1791 = vadd.f32 %v1672, 1.0
        %v1792 = vadd.f32 %v1674, 1.0
        %v1793 = vadd.f32 %v1676, 1.0
        %v1794 = vadd.f32 %v1678, 1.0
        %v1795 = vadd.f32 %v1680, 1.0
        %v1796 = vadd.f32 %v1682, 1.0
        %v1797 = vadd.f32 %v1684, 1.0
        %v1798 = vadd.f32 %v1686, 1.0
        %v1799 = vadd.f32 %v1688, 1.0
        %v1800 = vadd.f32 %v1690, 1.0
        %v1801 = vadd.f32 %v1692, 1.0
        %v1802 = vadd.f32 %v1694, 1.0
        %v1803 = vadd.f32 %v1696, 1.0
        %v1804 = vadd.f32 %v1698, 1.0
        %v1805 = vadd.f32 %v1700, 1.0
        %v1806 = vadd.f32 %v1702, 1.0
        %v1807 = vadd.f32 %v1704, 1.0
        %v1808 = vadd.f32 %v1706, 1.0
        %v1809 = vadd.f32 %v1708, 1.0
        %v1810 = vadd.f32 %v1710, 1.0
        %v1811 = vadd.f32 %v1712, 1.0
        %v1812 = vadd.f32 %v1714, 1.0
        %v1813 = vadd.f32 %v1716, 1.0
        %v1814 = vadd.f32 %v1718, 1.0
        %v1815 = vadd.f32 %v1720, 1.0
        %v1816 = vadd.f32 %v1722, 1.0
        %v1817 = vadd.f32 %v1724, 1.0
        %v1818 = vadd.f32 %v1726, 1.0
        %v1819 = vadd.f32 %v1728, 1.0
        %v1820 = vadd.f32 %v1730, 1.0
        %v1821 = vadd.f32 %v1732, 1.0
        %v1822 = vadd.f32 %v1734, 1.0
        %v1823 = vadd.f32 %v1736, 1.0
        %v1824 = vadd.f32 %v1738, 1.0
        %v1825 = vadd.f32 %v1740, 1.0
        %v1826 = vadd.f32 %v1742, 1.0
        %v1827 = vadd.f32 %v1744, 1.0
        %v1828 = vadd.f32 %v1746, 1.0
        %v1829 = vadd.f32 %v1748, 1.0
        %v1830 = vadd.f32 %v1750, 1.0
        %v1831 = vadd.f32 %v1752, 1.0
        %v1832 = vadd.f32 %v1754, 1.0
        %v1833 = vadd.f32 %v1756, 1.0
        %v1834 = vadd.f32 %v1758, 1.0
        %v1835 = vadd.f32 %v1760, 1.0
        %v1836 = vadd.f32 %v1762, 1.0
        %v1837 = vadd.f32 %v1764, 1.0
        %v1838 = vadd.f32 %v1766, 1.0
        %v1839 = vadd.f32 %v1768, 1.0
        %v1840 = vadd.f32 %v1770, 1.0
        %v1841 = vadd.f32 %v1772, 1.0
        %v1842 = vadd.f32 %v1774, 1.0
        %v1843 = vadd.f32 %v1776, 1.0
        %v1844 = vadd.f32 %v1778, 1.0
        %v1845 = vadd.f32 %v1780, 1.0
        %v1846 = vadd.f32 %v1782, 1.0
        %v1847 = vrcp.pop %v1783
        %v1848 = vmul.f32 %v1783, %v1847
        %v1849 = vsub.f32 1.0, %v1848
        %v1850 = vmul.f32 %v1847, %v1849
        %v1851 = vadd.f32 %v1847, %v1850
        %vm1852 = vweird.f32 %v1783
        %vm1853 = vweird.f32 %v1847
        %vm1854 = vmor %vm1852, %vm1853
        %v1855 = vsel %vm1854, %v1847, %v1851
        %v1856 = vand.u32 2147483647, %v1783
        %vm1857 = vcmp.eq.f32.partialorder %v1856, 8.507059e+37
        %v1858 = vand.u32 %v1783, 2147483648
        %v1859 = vor.u32 1.1754944e-38, %v1858
        %v1860 = vsel %vm1857, %v1859, %v1855
        %v1861 = vmul.f32 1.0, %v1860
        %v1862 = vrcp.pop %v1784
        %v1863 = vmul.f32 %v1784, %v1862
        %v1864 = vsub.f32 1.0, %v1863
        %v1865 = vmul.f32 %v1862, %v1864
        %v1866 = vadd.f32 %v1862, %v1865
        %vm1867 = vweird.f32 %v1784
        %vm1868 = vweird.f32 %v1862
        %vm1869 = vmor %vm1867, %vm1868
        %v1870 = vsel %vm1869, %v1862, %v1866
        %v1871 = vand.u32 2147483647, %v1784
        %vm1872 = vcmp.eq.f32.partialorder %v1871, 8.507059e+37
        %v1873 = vand.u32 %v1784, 2147483648
        %v1874 = vor.u32 1.1754944e-38, %v1873
        %v1875 = vsel %vm1872, %v1874, %v1870
        %v1876 = vmul.f32 1.0, %v1875
        %v1877 = vrcp.pop %v1785
        %v1878 = vmul.f32 %v1785, %v1877
        %v1879 = vsub.f32 1.0, %v1878
        %v1880 = vmul.f32 %v1877, %v1879
        %v1881 = vadd.f32 %v1877, %v1880
        %vm1882 = vweird.f32 %v1785
        %vm1883 = vweird.f32 %v1877
        %vm1884 = vmor %vm1882, %vm1883
        %v1885 = vsel %vm1884, %v1877, %v1881
        %v1886 = vand.u32 2147483647, %v1785
        %vm1887 = vcmp.eq.f32.partialorder %v1886, 8.507059e+37
        %v1888 = vand.u32 %v1785, 2147483648
        %v1889 = vor.u32 1.1754944e-38, %v1888
        %v1890 = vsel %vm1887, %v1889, %v1885
        %v1891 = vmul.f32 1.0, %v1890
        %v1892 = vrcp.pop %v1786
        %v1893 = vmul.f32 %v1786, %v1892
        %v1894 = vsub.f32 1.0, %v1893
        %v1895 = vmul.f32 %v1892, %v1894
        %v1896 = vadd.f32 %v1892, %v1895
        %vm1897 = vweird.f32 %v1786
        %vm1898 = vweird.f32 %v1892
        %vm1899 = vmor %vm1897, %vm1898
        %v1900 = vsel %vm1899, %v1892, %v1896
        %v1901 = vand.u32 2147483647, %v1786
        %vm1902 = vcmp.eq.f32.partialorder %v1901, 8.507059e+37
        %v1903 = vand.u32 %v1786, 2147483648
        %v1904 = vor.u32 1.1754944e-38, %v1903
        %v1905 = vsel %vm1902, %v1904, %v1900
        %v1906 = vmul.f32 1.0, %v1905
        %v1907 = vrcp.pop %v1787
        %v1908 = vmul.f32 %v1787, %v1907
        %v1909 = vsub.f32 1.0, %v1908
        %v1910 = vmul.f32 %v1907, %v1909
        %v1911 = vadd.f32 %v1907, %v1910
        %vm1912 = vweird.f32 %v1787
        %vm1913 = vweird.f32 %v1907
        %vm1914 = vmor %vm1912, %vm1913
        %v1915 = vsel %vm1914, %v1907, %v1911
        %v1916 = vand.u32 2147483647, %v1787
        %vm1917 = vcmp.eq.f32.partialorder %v1916, 8.507059e+37
        %v1918 = vand.u32 %v1787, 2147483648
        %v1919 = vor.u32 1.1754944e-38, %v1918
        %v1920 = vsel %vm1917, %v1919, %v1915
        %v1921 = vmul.f32 1.0, %v1920
        %v1922 = vrcp.pop %v1788
        %v1923 = vmul.f32 %v1788, %v1922
        %v1924 = vsub.f32 1.0, %v1923
        %v1925 = vmul.f32 %v1922, %v1924
        %v1926 = vadd.f32 %v1922, %v1925
        %vm1927 = vweird.f32 %v1788
        %vm1928 = vweird.f32 %v1922
        %vm1929 = vmor %vm1927, %vm1928
        %v1930 = vsel %vm1929, %v1922, %v1926
        %v1931 = vand.u32 2147483647, %v1788
        %vm1932 = vcmp.eq.f32.partialorder %v1931, 8.507059e+37
        %v1933 = vand.u32 %v1788, 2147483648
        %v1934 = vor.u32 1.1754944e-38, %v1933
        %v1935 = vsel %vm1932, %v1934, %v1930
        %v1936 = vmul.f32 1.0, %v1935
        %v1937 = vrcp.pop %v1789
        %v1938 = vmul.f32 %v1789, %v1937
        %v1939 = vsub.f32 1.0, %v1938
        %v1940 = vmul.f32 %v1937, %v1939
        %v1941 = vadd.f32 %v1937, %v1940
        %vm1942 = vweird.f32 %v1789
        %vm1943 = vweird.f32 %v1937
        %vm1944 = vmor %vm1942, %vm1943
        %v1945 = vsel %vm1944, %v1937, %v1941
        %v1946 = vand.u32 2147483647, %v1789
        %vm1947 = vcmp.eq.f32.partialorder %v1946, 8.507059e+37
        %v1948 = vand.u32 %v1789, 2147483648
        %v1949 = vor.u32 1.1754944e-38, %v1948
        %v1950 = vsel %vm1947, %v1949, %v1945
        %v1951 = vmul.f32 1.0, %v1950
        %v1952 = vrcp.pop %v1790
        %v1953 = vmul.f32 %v1790, %v1952
        %v1954 = vsub.f32 1.0, %v1953
        %v1955 = vmul.f32 %v1952, %v1954
        %v1956 = vadd.f32 %v1952, %v1955
        %vm1957 = vweird.f32 %v1790
        %vm1958 = vweird.f32 %v1952
        %vm1959 = vmor %vm1957, %vm1958
        %v1960 = vsel %vm1959, %v1952, %v1956
        %v1961 = vand.u32 2147483647, %v1790
        %vm1962 = vcmp.eq.f32.partialorder %v1961, 8.507059e+37
        %v1963 = vand.u32 %v1790, 2147483648
        %v1964 = vor.u32 1.1754944e-38, %v1963
        %v1965 = vsel %vm1962, %v1964, %v1960
        %v1966 = vmul.f32 1.0, %v1965
        %v1967 = vrcp.pop %v1791
        %v1968 = vmul.f32 %v1791, %v1967
        %v1969 = vsub.f32 1.0, %v1968
        %v1970 = vmul.f32 %v1967, %v1969
        %v1971 = vadd.f32 %v1967, %v1970
        %vm1972 = vweird.f32 %v1791
        %vm1973 = vweird.f32 %v1967
        %vm1974 = vmor %vm1972, %vm1973
        %v1975 = vsel %vm1974, %v1967, %v1971
        %v1976 = vand.u32 2147483647, %v1791
        %vm1977 = vcmp.eq.f32.partialorder %v1976, 8.507059e+37
        %v1978 = vand.u32 %v1791, 2147483648
        %v1979 = vor.u32 1.1754944e-38, %v1978
        %v1980 = vsel %vm1977, %v1979, %v1975
        %v1981 = vmul.f32 1.0, %v1980
        %v1982 = vrcp.pop %v1792
        %v1983 = vmul.f32 %v1792, %v1982
        %v1984 = vsub.f32 1.0, %v1983
        %v1985 = vmul.f32 %v1982, %v1984
        %v1986 = vadd.f32 %v1982, %v1985
        %vm1987 = vweird.f32 %v1792
        %vm1988 = vweird.f32 %v1982
        %vm1989 = vmor %vm1987, %vm1988
        %v1990 = vsel %vm1989, %v1982, %v1986
        %v1991 = vand.u32 2147483647, %v1792
        %vm1992 = vcmp.eq.f32.partialorder %v1991, 8.507059e+37
        %v1993 = vand.u32 %v1792, 2147483648
        %v1994 = vor.u32 1.1754944e-38, %v1993
        %v1995 = vsel %vm1992, %v1994, %v1990
        %v1996 = vmul.f32 1.0, %v1995
        %v1997 = vrcp.pop %v1793
        %v1998 = vmul.f32 %v1793, %v1997
        %v1999 = vsub.f32 1.0, %v1998
        %v2000 = vmul.f32 %v1997, %v1999
        %v2001 = vadd.f32 %v1997, %v2000
        %vm2002 = vweird.f32 %v1793
        %vm2003 = vweird.f32 %v1997
        %vm2004 = vmor %vm2002, %vm2003
        %v2005 = vsel %vm2004, %v1997, %v2001
        %v2006 = vand.u32 2147483647, %v1793
        %vm2007 = vcmp.eq.f32.partialorder %v2006, 8.507059e+37
        %v2008 = vand.u32 %v1793, 2147483648
        %v2009 = vor.u32 1.1754944e-38, %v2008
        %v2010 = vsel %vm2007, %v2009, %v2005
        %v2011 = vmul.f32 1.0, %v2010
        %v2012 = vrcp.pop %v1794
        %v2013 = vmul.f32 %v1794, %v2012
        %v2014 = vsub.f32 1.0, %v2013
        %v2015 = vmul.f32 %v2012, %v2014
        %v2016 = vadd.f32 %v2012, %v2015
        %vm2017 = vweird.f32 %v1794
        %vm2018 = vweird.f32 %v2012
        %vm2019 = vmor %vm2017, %vm2018
        %v2020 = vsel %vm2019, %v2012, %v2016
        %v2021 = vand.u32 2147483647, %v1794
        %vm2022 = vcmp.eq.f32.partialorder %v2021, 8.507059e+37
        %v2023 = vand.u32 %v1794, 2147483648
        %v2024 = vor.u32 1.1754944e-38, %v2023
        %v2025 = vsel %vm2022, %v2024, %v2020
        %v2026 = vmul.f32 1.0, %v2025
        %v2027 = vrcp.pop %v1795
        %v2028 = vmul.f32 %v1795, %v2027
        %v2029 = vsub.f32 1.0, %v2028
        %v2030 = vmul.f32 %v2027, %v2029
        %v2031 = vadd.f32 %v2027, %v2030
        %vm2032 = vweird.f32 %v1795
        %vm2033 = vweird.f32 %v2027
        %vm2034 = vmor %vm2032, %vm2033
        %v2035 = vsel %vm2034, %v2027, %v2031
        %v2036 = vand.u32 2147483647, %v1795
        %vm2037 = vcmp.eq.f32.partialorder %v2036, 8.507059e+37
        %v2038 = vand.u32 %v1795, 2147483648
        %v2039 = vor.u32 1.1754944e-38, %v2038
        %v2040 = vsel %vm2037, %v2039, %v2035
        %v2041 = vmul.f32 1.0, %v2040
        %v2042 = vrcp.pop %v1796
        %v2043 = vmul.f32 %v1796, %v2042
        %v2044 = vsub.f32 1.0, %v2043
        %v2045 = vmul.f32 %v2042, %v2044
        %v2046 = vadd.f32 %v2042, %v2045
        %vm2047 = vweird.f32 %v1796
        %vm2048 = vweird.f32 %v2042
        %vm2049 = vmor %vm2047, %vm2048
        %v2050 = vsel %vm2049, %v2042, %v2046
        %v2051 = vand.u32 2147483647, %v1796
        %vm2052 = vcmp.eq.f32.partialorder %v2051, 8.507059e+37
        %v2053 = vand.u32 %v1796, 2147483648
        %v2054 = vor.u32 1.1754944e-38, %v2053
        %v2055 = vsel %vm2052, %v2054, %v2050
        %v2056 = vmul.f32 1.0, %v2055
        %v2057 = vrcp.pop %v1797
        %v2058 = vmul.f32 %v1797, %v2057
        %v2059 = vsub.f32 1.0, %v2058
        %v2060 = vmul.f32 %v2057, %v2059
        %v2061 = vadd.f32 %v2057, %v2060
        %vm2062 = vweird.f32 %v1797
        %vm2063 = vweird.f32 %v2057
        %vm2064 = vmor %vm2062, %vm2063
        %v2065 = vsel %vm2064, %v2057, %v2061
        %v2066 = vand.u32 2147483647, %v1797
        %vm2067 = vcmp.eq.f32.partialorder %v2066, 8.507059e+37
        %v2068 = vand.u32 %v1797, 2147483648
        %v2069 = vor.u32 1.1754944e-38, %v2068
        %v2070 = vsel %vm2067, %v2069, %v2065
        %v2071 = vmul.f32 1.0, %v2070
        %v2072 = vrcp.pop %v1798
        %v2073 = vmul.f32 %v1798, %v2072
        %v2074 = vsub.f32 1.0, %v2073
        %v2075 = vmul.f32 %v2072, %v2074
        %v2076 = vadd.f32 %v2072, %v2075
        %vm2077 = vweird.f32 %v1798
        %vm2078 = vweird.f32 %v2072
        %vm2079 = vmor %vm2077, %vm2078
        %v2080 = vsel %vm2079, %v2072, %v2076
        %v2081 = vand.u32 2147483647, %v1798
        %vm2082 = vcmp.eq.f32.partialorder %v2081, 8.507059e+37
        %v2083 = vand.u32 %v1798, 2147483648
        %v2084 = vor.u32 1.1754944e-38, %v2083
        %v2085 = vsel %vm2082, %v2084, %v2080
        %v2086 = vmul.f32 1.0, %v2085
        %v2087 = vrcp.pop %v1799
        %v2088 = vmul.f32 %v1799, %v2087
        %v2089 = vsub.f32 1.0, %v2088
        %v2090 = vmul.f32 %v2087, %v2089
        %v2091 = vadd.f32 %v2087, %v2090
        %vm2092 = vweird.f32 %v1799
        %vm2093 = vweird.f32 %v2087
        %vm2094 = vmor %vm2092, %vm2093
        %v2095 = vsel %vm2094, %v2087, %v2091
        %v2096 = vand.u32 2147483647, %v1799
        %vm2097 = vcmp.eq.f32.partialorder %v2096, 8.507059e+37
        %v2098 = vand.u32 %v1799, 2147483648
        %v2099 = vor.u32 1.1754944e-38, %v2098
        %v2100 = vsel %vm2097, %v2099, %v2095
        %v2101 = vmul.f32 1.0, %v2100
        %v2102 = vrcp.pop %v1800
        %v2103 = vmul.f32 %v1800, %v2102
        %v2104 = vsub.f32 1.0, %v2103
        %v2105 = vmul.f32 %v2102, %v2104
        %v2106 = vadd.f32 %v2102, %v2105
        %vm2107 = vweird.f32 %v1800
        %vm2108 = vweird.f32 %v2102
        %vm2109 = vmor %vm2107, %vm2108
        %v2110 = vsel %vm2109, %v2102, %v2106
        %v2111 = vand.u32 2147483647, %v1800
        %vm2112 = vcmp.eq.f32.partialorder %v2111, 8.507059e+37
        %v2113 = vand.u32 %v1800, 2147483648
        %v2114 = vor.u32 1.1754944e-38, %v2113
        %v2115 = vsel %vm2112, %v2114, %v2110
        %v2116 = vmul.f32 1.0, %v2115
        %v2117 = vrcp.pop %v1801
        %v2118 = vmul.f32 %v1801, %v2117
        %v2119 = vsub.f32 1.0, %v2118
        %v2120 = vmul.f32 %v2117, %v2119
        %v2121 = vadd.f32 %v2117, %v2120
        %vm2122 = vweird.f32 %v1801
        %vm2123 = vweird.f32 %v2117
        %vm2124 = vmor %vm2122, %vm2123
        %v2125 = vsel %vm2124, %v2117, %v2121
        %v2126 = vand.u32 2147483647, %v1801
        %vm2127 = vcmp.eq.f32.partialorder %v2126, 8.507059e+37
        %v2128 = vand.u32 %v1801, 2147483648
        %v2129 = vor.u32 1.1754944e-38, %v2128
        %v2130 = vsel %vm2127, %v2129, %v2125
        %v2131 = vmul.f32 1.0, %v2130
        %v2132 = vrcp.pop %v1802
        %v2133 = vmul.f32 %v1802, %v2132
        %v2134 = vsub.f32 1.0, %v2133
        %v2135 = vmul.f32 %v2132, %v2134
        %v2136 = vadd.f32 %v2132, %v2135
        %vm2137 = vweird.f32 %v1802
        %vm2138 = vweird.f32 %v2132
        %vm2139 = vmor %vm2137, %vm2138
        %v2140 = vsel %vm2139, %v2132, %v2136
        %v2141 = vand.u32 2147483647, %v1802
        %vm2142 = vcmp.eq.f32.partialorder %v2141, 8.507059e+37
        %v2143 = vand.u32 %v1802, 2147483648
        %v2144 = vor.u32 1.1754944e-38, %v2143
        %v2145 = vsel %vm2142, %v2144, %v2140
        %v2146 = vmul.f32 1.0, %v2145
        %v2147 = vrcp.pop %v1803
        %v2148 = vmul.f32 %v1803, %v2147
        %v2149 = vsub.f32 1.0, %v2148
        %v2150 = vmul.f32 %v2147, %v2149
        %v2151 = vadd.f32 %v2147, %v2150
        %vm2152 = vweird.f32 %v1803
        %vm2153 = vweird.f32 %v2147
        %vm2154 = vmor %vm2152, %vm2153
        %v2155 = vsel %vm2154, %v2147, %v2151
        %v2156 = vand.u32 2147483647, %v1803
        %vm2157 = vcmp.eq.f32.partialorder %v2156, 8.507059e+37
        %v2158 = vand.u32 %v1803, 2147483648
        %v2159 = vor.u32 1.1754944e-38, %v2158
        %v2160 = vsel %vm2157, %v2159, %v2155
        %v2161 = vmul.f32 1.0, %v2160
        %v2162 = vrcp.pop %v1804
        %v2163 = vmul.f32 %v1804, %v2162
        %v2164 = vsub.f32 1.0, %v2163
        %v2165 = vmul.f32 %v2162, %v2164
        %v2166 = vadd.f32 %v2162, %v2165
        %vm2167 = vweird.f32 %v1804
        %vm2168 = vweird.f32 %v2162
        %vm2169 = vmor %vm2167, %vm2168
        %v2170 = vsel %vm2169, %v2162, %v2166
        %v2171 = vand.u32 2147483647, %v1804
        %vm2172 = vcmp.eq.f32.partialorder %v2171, 8.507059e+37
        %v2173 = vand.u32 %v1804, 2147483648
        %v2174 = vor.u32 1.1754944e-38, %v2173
        %v2175 = vsel %vm2172, %v2174, %v2170
        %v2176 = vmul.f32 1.0, %v2175
        %v2177 = vrcp.pop %v1805
        %v2178 = vmul.f32 %v1805, %v2177
        %v2179 = vsub.f32 1.0, %v2178
        %v2180 = vmul.f32 %v2177, %v2179
        %v2181 = vadd.f32 %v2177, %v2180
        %vm2182 = vweird.f32 %v1805
        %vm2183 = vweird.f32 %v2177
        %vm2184 = vmor %vm2182, %vm2183
        %v2185 = vsel %vm2184, %v2177, %v2181
        %v2186 = vand.u32 2147483647, %v1805
        %vm2187 = vcmp.eq.f32.partialorder %v2186, 8.507059e+37
        %v2188 = vand.u32 %v1805, 2147483648
        %v2189 = vor.u32 1.1754944e-38, %v2188
        %v2190 = vsel %vm2187, %v2189, %v2185
        %v2191 = vmul.f32 1.0, %v2190
        %v2192 = vrcp.pop %v1806
        %v2193 = vmul.f32 %v1806, %v2192
        %v2194 = vsub.f32 1.0, %v2193
        %v2195 = vmul.f32 %v2192, %v2194
        %v2196 = vadd.f32 %v2192, %v2195
        %vm2197 = vweird.f32 %v1806
        %vm2198 = vweird.f32 %v2192
        %vm2199 = vmor %vm2197, %vm2198
        %v2200 = vsel %vm2199, %v2192, %v2196
        %v2201 = vand.u32 2147483647, %v1806
        %vm2202 = vcmp.eq.f32.partialorder %v2201, 8.507059e+37
        %v2203 = vand.u32 %v1806, 2147483648
        %v2204 = vor.u32 1.1754944e-38, %v2203
        %v2205 = vsel %vm2202, %v2204, %v2200
        %v2206 = vmul.f32 1.0, %v2205
        %v2207 = vrcp.pop %v1807
        %v2208 = vmul.f32 %v1807, %v2207
        %v2209 = vsub.f32 1.0, %v2208
        %v2210 = vmul.f32 %v2207, %v2209
        %v2211 = vadd.f32 %v2207, %v2210
        %vm2212 = vweird.f32 %v1807
        %vm2213 = vweird.f32 %v2207
        %vm2214 = vmor %vm2212, %vm2213
        %v2215 = vsel %vm2214, %v2207, %v2211
        %v2216 = vand.u32 2147483647, %v1807
        %vm2217 = vcmp.eq.f32.partialorder %v2216, 8.507059e+37
        %v2218 = vand.u32 %v1807, 2147483648
        %v2219 = vor.u32 1.1754944e-38, %v2218
        %v2220 = vsel %vm2217, %v2219, %v2215
        %v2221 = vmul.f32 1.0, %v2220
        %v2222 = vrcp.pop %v1808
        %v2223 = vmul.f32 %v1808, %v2222
        %v2224 = vsub.f32 1.0, %v2223
        %v2225 = vmul.f32 %v2222, %v2224
        %v2226 = vadd.f32 %v2222, %v2225
        %vm2227 = vweird.f32 %v1808
        %vm2228 = vweird.f32 %v2222
        %vm2229 = vmor %vm2227, %vm2228
        %v2230 = vsel %vm2229, %v2222, %v2226
        %v2231 = vand.u32 2147483647, %v1808
        %vm2232 = vcmp.eq.f32.partialorder %v2231, 8.507059e+37
        %v2233 = vand.u32 %v1808, 2147483648
        %v2234 = vor.u32 1.1754944e-38, %v2233
        %v2235 = vsel %vm2232, %v2234, %v2230
        %v2236 = vmul.f32 1.0, %v2235
        %v2237 = vrcp.pop %v1809
        %v2238 = vmul.f32 %v1809, %v2237
        %v2239 = vsub.f32 1.0, %v2238
        %v2240 = vmul.f32 %v2237, %v2239
        %v2241 = vadd.f32 %v2237, %v2240
        %vm2242 = vweird.f32 %v1809
        %vm2243 = vweird.f32 %v2237
        %vm2244 = vmor %vm2242, %vm2243
        %v2245 = vsel %vm2244, %v2237, %v2241
        %v2246 = vand.u32 2147483647, %v1809
        %vm2247 = vcmp.eq.f32.partialorder %v2246, 8.507059e+37
        %v2248 = vand.u32 %v1809, 2147483648
        %v2249 = vor.u32 1.1754944e-38, %v2248
        %v2250 = vsel %vm2247, %v2249, %v2245
        %v2251 = vmul.f32 1.0, %v2250
        %v2252 = vrcp.pop %v1810
        %v2253 = vmul.f32 %v1810, %v2252
        %v2254 = vsub.f32 1.0, %v2253
        %v2255 = vmul.f32 %v2252, %v2254
        %v2256 = vadd.f32 %v2252, %v2255
        %vm2257 = vweird.f32 %v1810
        %vm2258 = vweird.f32 %v2252
        %vm2259 = vmor %vm2257, %vm2258
        %v2260 = vsel %vm2259, %v2252, %v2256
        %v2261 = vand.u32 2147483647, %v1810
        %vm2262 = vcmp.eq.f32.partialorder %v2261, 8.507059e+37
        %v2263 = vand.u32 %v1810, 2147483648
        %v2264 = vor.u32 1.1754944e-38, %v2263
        %v2265 = vsel %vm2262, %v2264, %v2260
        %v2266 = vmul.f32 1.0, %v2265
        %v2267 = vrcp.pop %v1811
        %v2268 = vmul.f32 %v1811, %v2267
        %v2269 = vsub.f32 1.0, %v2268
        %v2270 = vmul.f32 %v2267, %v2269
        %v2271 = vadd.f32 %v2267, %v2270
        %vm2272 = vweird.f32 %v1811
        %vm2273 = vweird.f32 %v2267
        %vm2274 = vmor %vm2272, %vm2273
        %v2275 = vsel %vm2274, %v2267, %v2271
        %v2276 = vand.u32 2147483647, %v1811
        %vm2277 = vcmp.eq.f32.partialorder %v2276, 8.507059e+37
        %v2278 = vand.u32 %v1811, 2147483648
        %v2279 = vor.u32 1.1754944e-38, %v2278
        %v2280 = vsel %vm2277, %v2279, %v2275
        %v2281 = vmul.f32 1.0, %v2280
        %v2282 = vrcp.pop %v1812
        %v2283 = vmul.f32 %v1812, %v2282
        %v2284 = vsub.f32 1.0, %v2283
        %v2285 = vmul.f32 %v2282, %v2284
        %v2286 = vadd.f32 %v2282, %v2285
        %vm2287 = vweird.f32 %v1812
        %vm2288 = vweird.f32 %v2282
        %vm2289 = vmor %vm2287, %vm2288
        %v2290 = vsel %vm2289, %v2282, %v2286
        %v2291 = vand.u32 2147483647, %v1812
        %vm2292 = vcmp.eq.f32.partialorder %v2291, 8.507059e+37
        %v2293 = vand.u32 %v1812, 2147483648
        %v2294 = vor.u32 1.1754944e-38, %v2293
        %v2295 = vsel %vm2292, %v2294, %v2290
        %v2296 = vmul.f32 1.0, %v2295
        %v2297 = vrcp.pop %v1813
        %v2298 = vmul.f32 %v1813, %v2297
        %v2299 = vsub.f32 1.0, %v2298
        %v2300 = vmul.f32 %v2297, %v2299
        %v2301 = vadd.f32 %v2297, %v2300
        %vm2302 = vweird.f32 %v1813
        %vm2303 = vweird.f32 %v2297
        %vm2304 = vmor %vm2302, %vm2303
        %v2305 = vsel %vm2304, %v2297, %v2301
        %v2306 = vand.u32 2147483647, %v1813
        %vm2307 = vcmp.eq.f32.partialorder %v2306, 8.507059e+37
        %v2308 = vand.u32 %v1813, 2147483648
        %v2309 = vor.u32 1.1754944e-38, %v2308
        %v2310 = vsel %vm2307, %v2309, %v2305
        %v2311 = vmul.f32 1.0, %v2310
        %v2312 = vrcp.pop %v1814
        %v2313 = vmul.f32 %v1814, %v2312
        %v2314 = vsub.f32 1.0, %v2313
        %v2315 = vmul.f32 %v2312, %v2314
        %v2316 = vadd.f32 %v2312, %v2315
        %vm2317 = vweird.f32 %v1814
        %vm2318 = vweird.f32 %v2312
        %vm2319 = vmor %vm2317, %vm2318
        %v2320 = vsel %vm2319, %v2312, %v2316
        %v2321 = vand.u32 2147483647, %v1814
        %vm2322 = vcmp.eq.f32.partialorder %v2321, 8.507059e+37
        %v2323 = vand.u32 %v1814, 2147483648
        %v2324 = vor.u32 1.1754944e-38, %v2323
        %v2325 = vsel %vm2322, %v2324, %v2320
        %v2326 = vmul.f32 1.0, %v2325
        %v2327 = vrcp.pop %v1815
        %v2328 = vmul.f32 %v1815, %v2327
        %v2329 = vsub.f32 1.0, %v2328
        %v2330 = vmul.f32 %v2327, %v2329
        %v2331 = vadd.f32 %v2327, %v2330
        %vm2332 = vweird.f32 %v1815
        %vm2333 = vweird.f32 %v2327
        %vm2334 = vmor %vm2332, %vm2333
        %v2335 = vsel %vm2334, %v2327, %v2331
        %v2336 = vand.u32 2147483647, %v1815
        %vm2337 = vcmp.eq.f32.partialorder %v2336, 8.507059e+37
        %v2338 = vand.u32 %v1815, 2147483648
        %v2339 = vor.u32 1.1754944e-38, %v2338
        %v2340 = vsel %vm2337, %v2339, %v2335
        %v2341 = vmul.f32 1.0, %v2340
        %v2342 = vrcp.pop %v1816
        %v2343 = vmul.f32 %v1816, %v2342
        %v2344 = vsub.f32 1.0, %v2343
        %v2345 = vmul.f32 %v2342, %v2344
        %v2346 = vadd.f32 %v2342, %v2345
        %vm2347 = vweird.f32 %v1816
        %vm2348 = vweird.f32 %v2342
        %vm2349 = vmor %vm2347, %vm2348
        %v2350 = vsel %vm2349, %v2342, %v2346
        %v2351 = vand.u32 2147483647, %v1816
        %vm2352 = vcmp.eq.f32.partialorder %v2351, 8.507059e+37
        %v2353 = vand.u32 %v1816, 2147483648
        %v2354 = vor.u32 1.1754944e-38, %v2353
        %v2355 = vsel %vm2352, %v2354, %v2350
        %v2356 = vmul.f32 1.0, %v2355
        %v2357 = vrcp.pop %v1817
        %v2358 = vmul.f32 %v1817, %v2357
        %v2359 = vsub.f32 1.0, %v2358
        %v2360 = vmul.f32 %v2357, %v2359
        %v2361 = vadd.f32 %v2357, %v2360
        %vm2362 = vweird.f32 %v1817
        %vm2363 = vweird.f32 %v2357
        %vm2364 = vmor %vm2362, %vm2363
        %v2365 = vsel %vm2364, %v2357, %v2361
        %v2366 = vand.u32 2147483647, %v1817
        %vm2367 = vcmp.eq.f32.partialorder %v2366, 8.507059e+37
        %v2368 = vand.u32 %v1817, 2147483648
        %v2369 = vor.u32 1.1754944e-38, %v2368
        %v2370 = vsel %vm2367, %v2369, %v2365
        %v2371 = vmul.f32 1.0, %v2370
        %v2372 = vrcp.pop %v1818
        %v2373 = vmul.f32 %v1818, %v2372
        %v2374 = vsub.f32 1.0, %v2373
        %v2375 = vmul.f32 %v2372, %v2374
        %v2376 = vadd.f32 %v2372, %v2375
        %vm2377 = vweird.f32 %v1818
        %vm2378 = vweird.f32 %v2372
        %vm2379 = vmor %vm2377, %vm2378
        %v2380 = vsel %vm2379, %v2372, %v2376
        %v2381 = vand.u32 2147483647, %v1818
        %vm2382 = vcmp.eq.f32.partialorder %v2381, 8.507059e+37
        %v2383 = vand.u32 %v1818, 2147483648
        %v2384 = vor.u32 1.1754944e-38, %v2383
        %v2385 = vsel %vm2382, %v2384, %v2380
        %v2386 = vmul.f32 1.0, %v2385
        %v2387 = vrcp.pop %v1819
        %v2388 = vmul.f32 %v1819, %v2387
        %v2389 = vsub.f32 1.0, %v2388
        %v2390 = vmul.f32 %v2387, %v2389
        %v2391 = vadd.f32 %v2387, %v2390
        %vm2392 = vweird.f32 %v1819
        %vm2393 = vweird.f32 %v2387
        %vm2394 = vmor %vm2392, %vm2393
        %v2395 = vsel %vm2394, %v2387, %v2391
        %v2396 = vand.u32 2147483647, %v1819
        %vm2397 = vcmp.eq.f32.partialorder %v2396, 8.507059e+37
        %v2398 = vand.u32 %v1819, 2147483648
        %v2399 = vor.u32 1.1754944e-38, %v2398
        %v2400 = vsel %vm2397, %v2399, %v2395
        %v2401 = vmul.f32 1.0, %v2400
        %v2402 = vrcp.pop %v1820
        %v2403 = vmul.f32 %v1820, %v2402
        %v2404 = vsub.f32 1.0, %v2403
        %v2405 = vmul.f32 %v2402, %v2404
        %v2406 = vadd.f32 %v2402, %v2405
        %vm2407 = vweird.f32 %v1820
        %vm2408 = vweird.f32 %v2402
        %vm2409 = vmor %vm2407, %vm2408
        %v2410 = vsel %vm2409, %v2402, %v2406
        %v2411 = vand.u32 2147483647, %v1820
        %vm2412 = vcmp.eq.f32.partialorder %v2411, 8.507059e+37
        %v2413 = vand.u32 %v1820, 2147483648
        %v2414 = vor.u32 1.1754944e-38, %v2413
        %v2415 = vsel %vm2412, %v2414, %v2410
        %v2416 = vmul.f32 1.0, %v2415
        %v2417 = vrcp.pop %v1821
        %v2418 = vmul.f32 %v1821, %v2417
        %v2419 = vsub.f32 1.0, %v2418
        %v2420 = vmul.f32 %v2417, %v2419
        %v2421 = vadd.f32 %v2417, %v2420
        %vm2422 = vweird.f32 %v1821
        %vm2423 = vweird.f32 %v2417
        %vm2424 = vmor %vm2422, %vm2423
        %v2425 = vsel %vm2424, %v2417, %v2421
        %v2426 = vand.u32 2147483647, %v1821
        %vm2427 = vcmp.eq.f32.partialorder %v2426, 8.507059e+37
        %v2428 = vand.u32 %v1821, 2147483648
        %v2429 = vor.u32 1.1754944e-38, %v2428
        %v2430 = vsel %vm2427, %v2429, %v2425
        %v2431 = vmul.f32 1.0, %v2430
        %v2432 = vrcp.pop %v1822
        %v2433 = vmul.f32 %v1822, %v2432
        %v2434 = vsub.f32 1.0, %v2433
        %v2435 = vmul.f32 %v2432, %v2434
        %v2436 = vadd.f32 %v2432, %v2435
        %vm2437 = vweird.f32 %v1822
        %vm2438 = vweird.f32 %v2432
        %vm2439 = vmor %vm2437, %vm2438
        %v2440 = vsel %vm2439, %v2432, %v2436
        %v2441 = vand.u32 2147483647, %v1822
        %vm2442 = vcmp.eq.f32.partialorder %v2441, 8.507059e+37
        %v2443 = vand.u32 %v1822, 2147483648
        %v2444 = vor.u32 1.1754944e-38, %v2443
        %v2445 = vsel %vm2442, %v2444, %v2440
        %v2446 = vmul.f32 1.0, %v2445
        %v2447 = vrcp.pop %v1823
        %v2448 = vmul.f32 %v1823, %v2447
        %v2449 = vsub.f32 1.0, %v2448
        %v2450 = vmul.f32 %v2447, %v2449
        %v2451 = vadd.f32 %v2447, %v2450
        %vm2452 = vweird.f32 %v1823
        %vm2453 = vweird.f32 %v2447
        %vm2454 = vmor %vm2452, %vm2453
        %v2455 = vsel %vm2454, %v2447, %v2451
        %v2456 = vand.u32 2147483647, %v1823
        %vm2457 = vcmp.eq.f32.partialorder %v2456, 8.507059e+37
        %v2458 = vand.u32 %v1823, 2147483648
        %v2459 = vor.u32 1.1754944e-38, %v2458
        %v2460 = vsel %vm2457, %v2459, %v2455
        %v2461 = vmul.f32 1.0, %v2460
        %v2462 = vrcp.pop %v1824
        %v2463 = vmul.f32 %v1824, %v2462
        %v2464 = vsub.f32 1.0, %v2463
        %v2465 = vmul.f32 %v2462, %v2464
        %v2466 = vadd.f32 %v2462, %v2465
        %vm2467 = vweird.f32 %v1824
        %vm2468 = vweird.f32 %v2462
        %vm2469 = vmor %vm2467, %vm2468
        %v2470 = vsel %vm2469, %v2462, %v2466
        %v2471 = vand.u32 2147483647, %v1824
        %vm2472 = vcmp.eq.f32.partialorder %v2471, 8.507059e+37
        %v2473 = vand.u32 %v1824, 2147483648
        %v2474 = vor.u32 1.1754944e-38, %v2473
        %v2475 = vsel %vm2472, %v2474, %v2470
        %v2476 = vmul.f32 1.0, %v2475
        %v2477 = vrcp.pop %v1825
        %v2478 = vmul.f32 %v1825, %v2477
        %v2479 = vsub.f32 1.0, %v2478
        %v2480 = vmul.f32 %v2477, %v2479
        %v2481 = vadd.f32 %v2477, %v2480
        %vm2482 = vweird.f32 %v1825
        %vm2483 = vweird.f32 %v2477
        %vm2484 = vmor %vm2482, %vm2483
        %v2485 = vsel %vm2484, %v2477, %v2481
        %v2486 = vand.u32 2147483647, %v1825
        %vm2487 = vcmp.eq.f32.partialorder %v2486, 8.507059e+37
        %v2488 = vand.u32 %v1825, 2147483648
        %v2489 = vor.u32 1.1754944e-38, %v2488
        %v2490 = vsel %vm2487, %v2489, %v2485
        %v2491 = vmul.f32 1.0, %v2490
        %v2492 = vrcp.pop %v1826
        %v2493 = vmul.f32 %v1826, %v2492
        %v2494 = vsub.f32 1.0, %v2493
        %v2495 = vmul.f32 %v2492, %v2494
        %v2496 = vadd.f32 %v2492, %v2495
        %vm2497 = vweird.f32 %v1826
        %vm2498 = vweird.f32 %v2492
        %vm2499 = vmor %vm2497, %vm2498
        %v2500 = vsel %vm2499, %v2492, %v2496
        %v2501 = vand.u32 2147483647, %v1826
        %vm2502 = vcmp.eq.f32.partialorder %v2501, 8.507059e+37
        %v2503 = vand.u32 %v1826, 2147483648
        %v2504 = vor.u32 1.1754944e-38, %v2503
        %v2505 = vsel %vm2502, %v2504, %v2500
        %v2506 = vmul.f32 1.0, %v2505
        %v2507 = vrcp.pop %v1827
        %v2508 = vmul.f32 %v1827, %v2507
        %v2509 = vsub.f32 1.0, %v2508
        %v2510 = vmul.f32 %v2507, %v2509
        %v2511 = vadd.f32 %v2507, %v2510
        %vm2512 = vweird.f32 %v1827
        %vm2513 = vweird.f32 %v2507
        %vm2514 = vmor %vm2512, %vm2513
        %v2515 = vsel %vm2514, %v2507, %v2511
        %v2516 = vand.u32 2147483647, %v1827
        %vm2517 = vcmp.eq.f32.partialorder %v2516, 8.507059e+37
        %v2518 = vand.u32 %v1827, 2147483648
        %v2519 = vor.u32 1.1754944e-38, %v2518
        %v2520 = vsel %vm2517, %v2519, %v2515
        %v2521 = vmul.f32 1.0, %v2520
        %v2522 = vrcp.pop %v1828
        %v2523 = vmul.f32 %v1828, %v2522
        %v2524 = vsub.f32 1.0, %v2523
        %v2525 = vmul.f32 %v2522, %v2524
        %v2526 = vadd.f32 %v2522, %v2525
        %vm2527 = vweird.f32 %v1828
        %vm2528 = vweird.f32 %v2522
        %vm2529 = vmor %vm2527, %vm2528
        %v2530 = vsel %vm2529, %v2522, %v2526
        %v2531 = vand.u32 2147483647, %v1828
        %vm2532 = vcmp.eq.f32.partialorder %v2531, 8.507059e+37
        %v2533 = vand.u32 %v1828, 2147483648
        %v2534 = vor.u32 1.1754944e-38, %v2533
        %v2535 = vsel %vm2532, %v2534, %v2530
        %v2536 = vmul.f32 1.0, %v2535
        %v2537 = vrcp.pop %v1829
        %v2538 = vmul.f32 %v1829, %v2537
        %v2539 = vsub.f32 1.0, %v2538
        %v2540 = vmul.f32 %v2537, %v2539
        %v2541 = vadd.f32 %v2537, %v2540
        %vm2542 = vweird.f32 %v1829
        %vm2543 = vweird.f32 %v2537
        %vm2544 = vmor %vm2542, %vm2543
        %v2545 = vsel %vm2544, %v2537, %v2541
        %v2546 = vand.u32 2147483647, %v1829
        %vm2547 = vcmp.eq.f32.partialorder %v2546, 8.507059e+37
        %v2548 = vand.u32 %v1829, 2147483648
        %v2549 = vor.u32 1.1754944e-38, %v2548
        %v2550 = vsel %vm2547, %v2549, %v2545
        %v2551 = vmul.f32 1.0, %v2550
        %v2552 = vrcp.pop %v1830
        %v2553 = vmul.f32 %v1830, %v2552
        %v2554 = vsub.f32 1.0, %v2553
        %v2555 = vmul.f32 %v2552, %v2554
        %v2556 = vadd.f32 %v2552, %v2555
        %vm2557 = vweird.f32 %v1830
        %vm2558 = vweird.f32 %v2552
        %vm2559 = vmor %vm2557, %vm2558
        %v2560 = vsel %vm2559, %v2552, %v2556
        %v2561 = vand.u32 2147483647, %v1830
        %vm2562 = vcmp.eq.f32.partialorder %v2561, 8.507059e+37
        %v2563 = vand.u32 %v1830, 2147483648
        %v2564 = vor.u32 1.1754944e-38, %v2563
        %v2565 = vsel %vm2562, %v2564, %v2560
        %v2566 = vmul.f32 1.0, %v2565
        %v2567 = vrcp.pop %v1831
        %v2568 = vmul.f32 %v1831, %v2567
        %v2569 = vsub.f32 1.0, %v2568
        %v2570 = vmul.f32 %v2567, %v2569
        %v2571 = vadd.f32 %v2567, %v2570
        %vm2572 = vweird.f32 %v1831
        %vm2573 = vweird.f32 %v2567
        %vm2574 = vmor %vm2572, %vm2573
        %v2575 = vsel %vm2574, %v2567, %v2571
        %v2576 = vand.u32 2147483647, %v1831
        %vm2577 = vcmp.eq.f32.partialorder %v2576, 8.507059e+37
        %v2578 = vand.u32 %v1831, 2147483648
        %v2579 = vor.u32 1.1754944e-38, %v2578
        %v2580 = vsel %vm2577, %v2579, %v2575
        %v2581 = vmul.f32 1.0, %v2580
        %v2582 = vrcp.pop %v1832
        %v2583 = vmul.f32 %v1832, %v2582
        %v2584 = vsub.f32 1.0, %v2583
        %v2585 = vmul.f32 %v2582, %v2584
        %v2586 = vadd.f32 %v2582, %v2585
        %vm2587 = vweird.f32 %v1832
        %vm2588 = vweird.f32 %v2582
        %vm2589 = vmor %vm2587, %vm2588
        %v2590 = vsel %vm2589, %v2582, %v2586
        %v2591 = vand.u32 2147483647, %v1832
        %vm2592 = vcmp.eq.f32.partialorder %v2591, 8.507059e+37
        %v2593 = vand.u32 %v1832, 2147483648
        %v2594 = vor.u32 1.1754944e-38, %v2593
        %v2595 = vsel %vm2592, %v2594, %v2590
        %v2596 = vmul.f32 1.0, %v2595
        %v2597 = vrcp.pop %v1833
        %v2598 = vmul.f32 %v1833, %v2597
        %v2599 = vsub.f32 1.0, %v2598
        %v2600 = vmul.f32 %v2597, %v2599
        %v2601 = vadd.f32 %v2597, %v2600
        %vm2602 = vweird.f32 %v1833
        %vm2603 = vweird.f32 %v2597
        %vm2604 = vmor %vm2602, %vm2603
        %v2605 = vsel %vm2604, %v2597, %v2601
        %v2606 = vand.u32 2147483647, %v1833
        %vm2607 = vcmp.eq.f32.partialorder %v2606, 8.507059e+37
        %v2608 = vand.u32 %v1833, 2147483648
        %v2609 = vor.u32 1.1754944e-38, %v2608
        %v2610 = vsel %vm2607, %v2609, %v2605
        %v2611 = vmul.f32 1.0, %v2610
        %v2612 = vrcp.pop %v1834
        %v2613 = vmul.f32 %v1834, %v2612
        %v2614 = vsub.f32 1.0, %v2613
        %v2615 = vmul.f32 %v2612, %v2614
        %v2616 = vadd.f32 %v2612, %v2615
        %vm2617 = vweird.f32 %v1834
        %vm2618 = vweird.f32 %v2612
        %vm2619 = vmor %vm2617, %vm2618
        %v2620 = vsel %vm2619, %v2612, %v2616
        %v2621 = vand.u32 2147483647, %v1834
        %vm2622 = vcmp.eq.f32.partialorder %v2621, 8.507059e+37
        %v2623 = vand.u32 %v1834, 2147483648
        %v2624 = vor.u32 1.1754944e-38, %v2623
        %v2625 = vsel %vm2622, %v2624, %v2620
        %v2626 = vmul.f32 1.0, %v2625
        %v2627 = vrcp.pop %v1835
        %v2628 = vmul.f32 %v1835, %v2627
        %v2629 = vsub.f32 1.0, %v2628
        %v2630 = vmul.f32 %v2627, %v2629
        %v2631 = vadd.f32 %v2627, %v2630
        %vm2632 = vweird.f32 %v1835
        %vm2633 = vweird.f32 %v2627
        %vm2634 = vmor %vm2632, %vm2633
        %v2635 = vsel %vm2634, %v2627, %v2631
        %v2636 = vand.u32 2147483647, %v1835
        %vm2637 = vcmp.eq.f32.partialorder %v2636, 8.507059e+37
        %v2638 = vand.u32 %v1835, 2147483648
        %v2639 = vor.u32 1.1754944e-38, %v2638
        %v2640 = vsel %vm2637, %v2639, %v2635
        %v2641 = vmul.f32 1.0, %v2640
        %v2642 = vrcp.pop %v1836
        %v2643 = vmul.f32 %v1836, %v2642
        %v2644 = vsub.f32 1.0, %v2643
        %v2645 = vmul.f32 %v2642, %v2644
        %v2646 = vadd.f32 %v2642, %v2645
        %vm2647 = vweird.f32 %v1836
        %vm2648 = vweird.f32 %v2642
        %vm2649 = vmor %vm2647, %vm2648
        %v2650 = vsel %vm2649, %v2642, %v2646
        %v2651 = vand.u32 2147483647, %v1836
        %vm2652 = vcmp.eq.f32.partialorder %v2651, 8.507059e+37
        %v2653 = vand.u32 %v1836, 2147483648
        %v2654 = vor.u32 1.1754944e-38, %v2653
        %v2655 = vsel %vm2652, %v2654, %v2650
        %v2656 = vmul.f32 1.0, %v2655
        %v2657 = vrcp.pop %v1837
        %v2658 = vmul.f32 %v1837, %v2657
        %v2659 = vsub.f32 1.0, %v2658
        %v2660 = vmul.f32 %v2657, %v2659
        %v2661 = vadd.f32 %v2657, %v2660
        %vm2662 = vweird.f32 %v1837
        %vm2663 = vweird.f32 %v2657
        %vm2664 = vmor %vm2662, %vm2663
        %v2665 = vsel %vm2664, %v2657, %v2661
        %v2666 = vand.u32 2147483647, %v1837
        %vm2667 = vcmp.eq.f32.partialorder %v2666, 8.507059e+37
        %v2668 = vand.u32 %v1837, 2147483648
        %v2669 = vor.u32 1.1754944e-38, %v2668
        %v2670 = vsel %vm2667, %v2669, %v2665
        %v2671 = vmul.f32 1.0, %v2670
        %v2672 = vrcp.pop %v1838
        %v2673 = vmul.f32 %v1838, %v2672
        %v2674 = vsub.f32 1.0, %v2673
        %v2675 = vmul.f32 %v2672, %v2674
        %v2676 = vadd.f32 %v2672, %v2675
        %vm2677 = vweird.f32 %v1838
        %vm2678 = vweird.f32 %v2672
        %vm2679 = vmor %vm2677, %vm2678
        %v2680 = vsel %vm2679, %v2672, %v2676
        %v2681 = vand.u32 2147483647, %v1838
        %vm2682 = vcmp.eq.f32.partialorder %v2681, 8.507059e+37
        %v2683 = vand.u32 %v1838, 2147483648
        %v2684 = vor.u32 1.1754944e-38, %v2683
        %v2685 = vsel %vm2682, %v2684, %v2680
        %v2686 = vmul.f32 1.0, %v2685
        %v2687 = vrcp.pop %v1839
        %v2688 = vmul.f32 %v1839, %v2687
        %v2689 = vsub.f32 1.0, %v2688
        %v2690 = vmul.f32 %v2687, %v2689
        %v2691 = vadd.f32 %v2687, %v2690
        %vm2692 = vweird.f32 %v1839
        %vm2693 = vweird.f32 %v2687
        %vm2694 = vmor %vm2692, %vm2693
        %v2695 = vsel %vm2694, %v2687, %v2691
        %v2696 = vand.u32 2147483647, %v1839
        %vm2697 = vcmp.eq.f32.partialorder %v2696, 8.507059e+37
        %v2698 = vand.u32 %v1839, 2147483648
        %v2699 = vor.u32 1.1754944e-38, %v2698
        %v2700 = vsel %vm2697, %v2699, %v2695
        %v2701 = vmul.f32 1.0, %v2700
        %v2702 = vrcp.pop %v1840
        %v2703 = vmul.f32 %v1840, %v2702
        %v2704 = vsub.f32 1.0, %v2703
        %v2705 = vmul.f32 %v2702, %v2704
        %v2706 = vadd.f32 %v2702, %v2705
        %vm2707 = vweird.f32 %v1840
        %vm2708 = vweird.f32 %v2702
        %vm2709 = vmor %vm2707, %vm2708
        %v2710 = vsel %vm2709, %v2702, %v2706
        %v2711 = vand.u32 2147483647, %v1840
        %vm2712 = vcmp.eq.f32.partialorder %v2711, 8.507059e+37
        %v2713 = vand.u32 %v1840, 2147483648
        %v2714 = vor.u32 1.1754944e-38, %v2713
        %v2715 = vsel %vm2712, %v2714, %v2710
        %v2716 = vmul.f32 1.0, %v2715
        %v2717 = vrcp.pop %v1841
        %v2718 = vmul.f32 %v1841, %v2717
        %v2719 = vsub.f32 1.0, %v2718
        %v2720 = vmul.f32 %v2717, %v2719
        %v2721 = vadd.f32 %v2717, %v2720
        %vm2722 = vweird.f32 %v1841
        %vm2723 = vweird.f32 %v2717
        %vm2724 = vmor %vm2722, %vm2723
        %v2725 = vsel %vm2724, %v2717, %v2721
        %v2726 = vand.u32 2147483647, %v1841
        %vm2727 = vcmp.eq.f32.partialorder %v2726, 8.507059e+37
        %v2728 = vand.u32 %v1841, 2147483648
        %v2729 = vor.u32 1.1754944e-38, %v2728
        %v2730 = vsel %vm2727, %v2729, %v2725
        %v2731 = vmul.f32 1.0, %v2730
        %v2732 = vrcp.pop %v1842
        %v2733 = vmul.f32 %v1842, %v2732
        %v2734 = vsub.f32 1.0, %v2733
        %v2735 = vmul.f32 %v2732, %v2734
        %v2736 = vadd.f32 %v2732, %v2735
        %vm2737 = vweird.f32 %v1842
        %vm2738 = vweird.f32 %v2732
        %vm2739 = vmor %vm2737, %vm2738
        %v2740 = vsel %vm2739, %v2732, %v2736
        %v2741 = vand.u32 2147483647, %v1842
        %vm2742 = vcmp.eq.f32.partialorder %v2741, 8.507059e+37
        %v2743 = vand.u32 %v1842, 2147483648
        %v2744 = vor.u32 1.1754944e-38, %v2743
        %v2745 = vsel %vm2742, %v2744, %v2740
        %v2746 = vmul.f32 1.0, %v2745
        %v2747 = vrcp.pop %v1843
        %v2748 = vmul.f32 %v1843, %v2747
        %v2749 = vsub.f32 1.0, %v2748
        %v2750 = vmul.f32 %v2747, %v2749
        %v2751 = vadd.f32 %v2747, %v2750
        %vm2752 = vweird.f32 %v1843
        %vm2753 = vweird.f32 %v2747
        %vm2754 = vmor %vm2752, %vm2753
        %v2755 = vsel %vm2754, %v2747, %v2751
        %v2756 = vand.u32 2147483647, %v1843
        %vm2757 = vcmp.eq.f32.partialorder %v2756, 8.507059e+37
        %v2758 = vand.u32 %v1843, 2147483648
        %v2759 = vor.u32 1.1754944e-38, %v2758
        %v2760 = vsel %vm2757, %v2759, %v2755
        %v2761 = vmul.f32 1.0, %v2760
        %v2762 = vrcp.pop %v1844
        %v2763 = vmul.f32 %v1844, %v2762
        %v2764 = vsub.f32 1.0, %v2763
        %v2765 = vmul.f32 %v2762, %v2764
        %v2766 = vadd.f32 %v2762, %v2765
        %vm2767 = vweird.f32 %v1844
        %vm2768 = vweird.f32 %v2762
        %vm2769 = vmor %vm2767, %vm2768
        %v2770 = vsel %vm2769, %v2762, %v2766
        %v2771 = vand.u32 2147483647, %v1844
        %vm2772 = vcmp.eq.f32.partialorder %v2771, 8.507059e+37
        %v2773 = vand.u32 %v1844, 2147483648
        %v2774 = vor.u32 1.1754944e-38, %v2773
        %v2775 = vsel %vm2772, %v2774, %v2770
        %v2776 = vmul.f32 1.0, %v2775
        %v2777 = vrcp.pop %v1845
        %v2778 = vmul.f32 %v1845, %v2777
        %v2779 = vsub.f32 1.0, %v2778
        %v2780 = vmul.f32 %v2777, %v2779
        %v2781 = vadd.f32 %v2777, %v2780
        %vm2782 = vweird.f32 %v1845
        %vm2783 = vweird.f32 %v2777
        %vm2784 = vmor %vm2782, %vm2783
        %v2785 = vsel %vm2784, %v2777, %v2781
        %v2786 = vand.u32 2147483647, %v1845
        %vm2787 = vcmp.eq.f32.partialorder %v2786, 8.507059e+37
        %v2788 = vand.u32 %v1845, 2147483648
        %v2789 = vor.u32 1.1754944e-38, %v2788
        %v2790 = vsel %vm2787, %v2789, %v2785
        %v2791 = vmul.f32 1.0, %v2790
        %v2792 = vrcp.pop %v1846
        %v2793 = vmul.f32 %v1846, %v2792
        %v2794 = vsub.f32 1.0, %v2793
        %v2795 = vmul.f32 %v2792, %v2794
        %v2796 = vadd.f32 %v2792, %v2795
        %vm2797 = vweird.f32 %v1846
        %vm2798 = vweird.f32 %v2792
        %vm2799 = vmor %vm2797, %vm2798
        %v2800 = vsel %vm2799, %v2792, %v2796
        %v2801 = vand.u32 2147483647, %v1846
        %vm2802 = vcmp.eq.f32.partialorder %v2801, 8.507059e+37
        %v2803 = vand.u32 %v1846, 2147483648
        %v2804 = vor.u32 1.1754944e-38, %v2803
        %v2805 = vsel %vm2802, %v2804, %v2800
        %v2806 = vmul.f32 1.0, %v2805
        %v2807 = vmul.f32 %v1861, 5.0
        %v2808 = vmul.f32 %v1876, 5.0
        %v2809 = vmul.f32 %v1891, 5.0
        %v2810 = vmul.f32 %v1906, 5.0
        %v2811 = vmul.f32 %v1921, 5.0
        %v2812 = vmul.f32 %v1936, 5.0
        %v2813 = vmul.f32 %v1951, 5.0
        %v2814 = vmul.f32 %v1966, 5.0
        %v2815 = vmul.f32 %v1981, 5.0
        %v2816 = vmul.f32 %v1996, 5.0
        %v2817 = vmul.f32 %v2011, 5.0
        %v2818 = vmul.f32 %v2026, 5.0
        %v2819 = vmul.f32 %v2041, 5.0
        %v2820 = vmul.f32 %v2056, 5.0
        %v2821 = vmul.f32 %v2071, 5.0
        %v2822 = vmul.f32 %v2086, 5.0
        %v2823 = vmul.f32 %v2101, 5.0
        %v2824 = vmul.f32 %v2116, 5.0
        %v2825 = vmul.f32 %v2131, 5.0
        %v2826 = vmul.f32 %v2146, 5.0
        %v2827 = vmul.f32 %v2161, 5.0
        %v2828 = vmul.f32 %v2176, 5.0
        %v2829 = vmul.f32 %v2191, 5.0
        %v2830 = vmul.f32 %v2206, 5.0
        %v2831 = vmul.f32 %v2221, 5.0
        %v2832 = vmul.f32 %v2236, 5.0
        %v2833 = vmul.f32 %v2251, 5.0
        %v2834 = vmul.f32 %v2266, 5.0
        %v2835 = vmul.f32 %v2281, 5.0
        %v2836 = vmul.f32 %v2296, 5.0
        %v2837 = vmul.f32 %v2311, 5.0
        %v2838 = vmul.f32 %v2326, 5.0
        %v2839 = vmul.f32 %v2341, 5.0
        %v2840 = vmul.f32 %v2356, 5.0
        %v2841 = vmul.f32 %v2371, 5.0
        %v2842 = vmul.f32 %v2386, 5.0
        %v2843 = vmul.f32 %v2401, 5.0
        %v2844 = vmul.f32 %v2416, 5.0
        %v2845 = vmul.f32 %v2431, 5.0
        %v2846 = vmul.f32 %v2446, 5.0
        %v2847 = vmul.f32 %v2461, 5.0
        %v2848 = vmul.f32 %v2476, 5.0
        %v2849 = vmul.f32 %v2491, 5.0
        %v2850 = vmul.f32 %v2506, 5.0
        %v2851 = vmul.f32 %v2521, 5.0
        %v2852 = vmul.f32 %v2536, 5.0
        %v2853 = vmul.f32 %v2551, 5.0
        %v2854 = vmul.f32 %v2566, 5.0
        %v2855 = vmul.f32 %v2581, 5.0
        %v2856 = vmul.f32 %v2596, 5.0
        %v2857 = vmul.f32 %v2611, 5.0
        %v2858 = vmul.f32 %v2626, 5.0
        %v2859 = vmul.f32 %v2641, 5.0
        %v2860 = vmul.f32 %v2656, 5.0
        %v2861 = vmul.f32 %v2671, 5.0
        %v2862 = vmul.f32 %v2686, 5.0
        %v2863 = vmul.f32 %v2701, 5.0
        %v2864 = vmul.f32 %v2716, 5.0
        %v2865 = vmul.f32 %v2731, 5.0
        %v2866 = vmul.f32 %v2746, 5.0
        %v2867 = vmul.f32 %v2761, 5.0
        %v2868 = vmul.f32 %v2776, 5.0
        %v2869 = vmul.f32 %v2791, 5.0
        %v2870 = vmul.f32 %v2806, 5.0
        %2871 = vst [vmem:[%s278] sm:$0xff] %v2807
        %2872 = vst [vmem:[%s278 + $0x8] sm:$0xff] %v2808
        %2873 = vst [vmem:[%s278 + $0x10] sm:$0xff] %v2809
        %2874 = vst [vmem:[%s278 + $0x18] sm:$0xff] %v2810
        %2875 = vst [vmem:[%s278 + $0x20] sm:$0xff] %v2811
        %2876 = vst [vmem:[%s278 + $0x28] sm:$0xff] %v2812
        %2877 = vst [vmem:[%s278 + $0x30] sm:$0xff] %v2813
        %2878 = vst [vmem:[%s278 + $0x38] sm:$0xff] %v2814
        %2879 = vst [vmem:[%s278 + $0x40] sm:$0xff] %v2815
        %2880 = vst [vmem:[%s278 + $0x48] sm:$0xff] %v2816
        %2881 = vst [vmem:[%s278 + $0x50] sm:$0xff] %v2817
        %2882 = vst [vmem:[%s278 + $0x58] sm:$0xff] %v2818
        %2883 = vst [vmem:[%s278 + $0x60] sm:$0xff] %v2819
        %2884 = vst [vmem:[%s278 + $0x68] sm:$0xff] %v2820
        %2885 = vst [vmem:[%s278 + $0x70] sm:$0xff] %v2821
        %2886 = vst [vmem:[%s278 + $0x78] sm:$0xff] %v2822
        %2887 = vst [vmem:[%s278 + $0x80] sm:$0xff] %v2823
        %2888 = vst [vmem:[%s278 + $0x88] sm:$0xff] %v2824
        %2889 = vst [vmem:[%s278 + $0x90] sm:$0xff] %v2825
        %2890 = vst [vmem:[%s278 + $0x98] sm:$0xff] %v2826
        %2891 = vst [vmem:[%s278 + $0xa0] sm:$0xff] %v2827
        %2892 = vst [vmem:[%s278 + $0xa8] sm:$0xff] %v2828
        %2893 = vst [vmem:[%s278 + $0xb0] sm:$0xff] %v2829
        %2894 = vst [vmem:[%s278 + $0xb8] sm:$0xff] %v2830
        %2895 = vst [vmem:[%s278 + $0xc0] sm:$0xff] %v2831
        %2896 = vst [vmem:[%s278 + $0xc8] sm:$0xff] %v2832
        %2897 = vst [vmem:[%s278 + $0xd0] sm:$0xff] %v2833
        %2898 = vst [vmem:[%s278 + $0xd8] sm:$0xff] %v2834
        %2899 = vst [vmem:[%s278 + $0xe0] sm:$0xff] %v2835
        %2900 = vst [vmem:[%s278 + $0xe8] sm:$0xff] %v2836
        %2901 = vst [vmem:[%s278 + $0xf0] sm:$0xff] %v2837
        %2902 = vst [vmem:[%s278 + $0xf8] sm:$0xff] %v2838
        %2903 = vst [vmem:[%s278 + $0x100] sm:$0xff] %v2839
        %2904 = vst [vmem:[%s278 + $0x108] sm:$0xff] %v2840
        %2905 = vst [vmem:[%s278 + $0x110] sm:$0xff] %v2841
        %2906 = vst [vmem:[%s278 + $0x118] sm:$0xff] %v2842
        %2907 = vst [vmem:[%s278 + $0x120] sm:$0xff] %v2843
        %2908 = vst [vmem:[%s278 + $0x128] sm:$0xff] %v2844
        %2909 = vst [vmem:[%s278 + $0x130] sm:$0xff] %v2845
        %2910 = vst [vmem:[%s278 + $0x138] sm:$0xff] %v2846
        %2911 = vst [vmem:[%s278 + $0x140] sm:$0xff] %v2847
        %2912 = vst [vmem:[%s278 + $0x148] sm:$0xff] %v2848
        %2913 = vst [vmem:[%s278 + $0x150] sm:$0xff] %v2849
        %2914 = vst [vmem:[%s278 + $0x158] sm:$0xff] %v2850
        %2915 = vst [vmem:[%s278 + $0x160] sm:$0xff] %v2851
        %2916 = vst [vmem:[%s278 + $0x168] sm:$0xff] %v2852
        %2917 = vst [vmem:[%s278 + $0x170] sm:$0xff] %v2853
        %2918 = vst [vmem:[%s278 + $0x178] sm:$0xff] %v2854
        %2919 = vst [vmem:[%s278 + $0x180] sm:$0xff] %v2855
        %2920 = vst [vmem:[%s278 + $0x188] sm:$0xff] %v2856
        %2921 = vst [vmem:[%s278 + $0x190] sm:$0xff] %v2857
        %2922 = vst [vmem:[%s278 + $0x198] sm:$0xff] %v2858
        %2923 = vst [vmem:[%s278 + $0x1a0] sm:$0xff] %v2859
        %2924 = vst [vmem:[%s278 + $0x1a8] sm:$0xff] %v2860
        %2925 = vst [vmem:[%s278 + $0x1b0] sm:$0xff] %v2861
        %2926 = vst [vmem:[%s278 + $0x1b8] sm:$0xff] %v2862
        %2927 = vst [vmem:[%s278 + $0x1c0] sm:$0xff] %v2863
        %2928 = vst [vmem:[%s278 + $0x1c8] sm:$0xff] %v2864
        %2929 = vst [vmem:[%s278 + $0x1d0] sm:$0xff] %v2865
        %2930 = vst [vmem:[%s278 + $0x1d8] sm:$0xff] %v2866
        %2931 = vst [vmem:[%s278 + $0x1e0] sm:$0xff] %v2867
        %2932 = vst [vmem:[%s278 + $0x1e8] sm:$0xff] %v2868
        %2933 = vst [vmem:[%s278 + $0x1f0] sm:$0xff] %v2869
        %2934 = vst [vmem:[%s278 + $0x1f8] sm:$0xff] %v2870
        %s2935 = sand.u32 %s141, 1
        %s2936 = scalar_lea.sflag [#allocation4], %s2935
        %s2937 = sand.u32 %s141, 1
        %s2938 = smul.addr %s2937, 512
        %s2939 = scalar_lea.vmem [#allocation8], %s2938
        // Predicated region
        $region53: #{tpu_custom_call.1} parent=39 // pred_check
          %p2940 = pneg %p151
        $region54: #{tpu_custom_call.1} parent=39 // pred_check_branch
          %2942 = sbr.rel (%p2940) target = $region56
        $region55: #{tpu_custom_call.1} parent=39 // pred_region
          %s2943 = smul.u32 32, %s23
          %2945 = vsyncadd %s2936, 0
          %s2946 = smul.addr %s2943, 2
          %s2947 = smul.addr %s2946, 8
          %s2948 = scalar_lea.hbm %s5, %s2947
          %s2949 = sshll.u32 %s2939, 4
          %s2950 = int_to_ptr.vmem [resolvable:$true] %s2949
          %s2951 = sshll.u32 %s2948, 4
          %s2952 = int_to_ptr.hbm [resolvable:$true] %s2951
          %2957 = dma.vmem_to_hbm [thread:$0]  %s2950, 8192, %s2952, %s2936, 256, 256, 16
        $region56: #{tpu_custom_call.1} parent=39 // pred_fallthru
          _
      $region40: #{tpu_custom_call.1} parent=5 // pred_fallthru
        _
      %p2958 = scmp.le.s32.totalorder 2, %s18
      // Predicated region
      $region57: #{tpu_custom_call.1} parent=5 // pred_check
        %p2959 = pneg %p2958
      $region58: #{tpu_custom_call.1} parent=5 // pred_check_branch
        %2961 = sbr.rel (%p2959) target = $region60
      $region59: #{tpu_custom_call.1} parent=5 // pred_region
        %s2962 = ssub.s32 %s18, 2
        // Predicated region
        $region61: #{tpu_custom_call.1} parent=59 // pred_check
          %p2963 = pneg %p157
        $region62: #{tpu_custom_call.1} parent=59 // pred_check_branch
          %2965 = sbr.rel (%p2963) target = $region64
        $region63: #{tpu_custom_call.1} parent=59 // pred_region
          %s2966 = sand.u32 %s142, 1
          %s2967 = scalar_lea.sflag [#allocation4], %s2966
          %s2968 = sand.u32 %s142, 1
          %s2969 = smul.addr %s2968, 512
          %s2970 = scalar_lea.vmem [#allocation8], %s2969
          %2972 = dma.done %s2967, 8192
        $region64: #{tpu_custom_call.1} parent=59 // pred_fallthru
          _
      $region60: #{tpu_custom_call.1} parent=5 // pred_fallthru
        _
    $region6: #{tpu_custom_call.1} parent=1 // loop_footer
      %s22 = sadd.s32 1, %s18
    $region7: #{tpu_custom_call.1} parent=1 // loop_footer_branch
      %17 = sbr.rel target = $region3
    $region8: #{tpu_custom_call.1} parent=1 // loop_exit
      _
    %2973 = vsyncpa [#allocation3], 1
    %s2974 = scalar_lea.sflag [#allocation3], 1
    %2975 = vsyncpa %s2974, 1
    %2976 = vsyncpa [#allocation6], 1
    %2977 = vsyncpa [#allocation4], 1
    %s2978 = scalar_lea.sflag [#allocation4], 1
    %2979 = vsyncpa %s2978, 1

</llo_original>
